<compile_context>
chip_gen: v7x
topology: tpu7x:2x2x1
jax: 0.10.0
libtpu: 0.0.40
codegen_flags: <defaults>
</compile_context>

<pallas_src>
import functools
import math

import jax
import jax.numpy as jnp
from jax import lax
from jax.experimental import pallas as pl
from jax.experimental.pallas import tpu as pltpu

EPS = 1e-5
MAX_TILE1 = 1024     # rows/step for the x-heavy layer-1 kernel (f32 x block ~3.1 MB)
MAX_TILE2 = 8192     # rows/step for the small-activation layer-2/3 kernels


def _round_up(x, m):
    return (x + m - 1) // m * m


def _pick_tile(n_pad, max_tile):
    """Largest multiple of 16 that divides n_pad, capped at max_tile."""
    units = n_pad // 16
    return 16 * math.gcd(units, max_tile // 16)


# --------------------------------------------------------------------------
# Shared helper: write this tile's partial sum / sum-of-squares.  Only the
# (at most one) partially filled last tile pays for the iota/where masking.
# --------------------------------------------------------------------------
def _store_partial_stats(h, s_ref, ss_ref, i, tile_n, n_true, n_pad):
    def write(hv):
        s_ref[...] = jnp.sum(hv, axis=0, keepdims=True)[None]          # (1,1,F)
        ss_ref[...] = jnp.sum(hv * hv, axis=0, keepdims=True)[None]    # (1,1,F)

    if n_pad == n_true:                       # no padded rows at all (static)
        write(h)
        return

    needs_mask = (i + 1) * tile_n > n_true    # only true for the last tile(s)

    @pl.when(jnp.logical_not(needs_mask))
    def _():
        write(h)

    @pl.when(needs_mask)
    def _():
        row = i * tile_n + lax.broadcasted_iota(jnp.int32, h.shape, 0)
        write(jnp.where(row < n_true, h, 0.0))


# --------------------------------------------------------------------------
# Shared helper: reduce partial stats and apply BatchNorm to the input tile.
# Recomputed per grid step (tiny: F<=64 vector math), which keeps every grid
# axis "parallel" (no cross-tile init dependency).
# --------------------------------------------------------------------------
def _apply_bn(s_part_ref, ss_part_ref, g_ref, be_ref, h_in_ref, n_true):
    inv_n = 1.0 / float(n_true)
    s = jnp.sum(s_part_ref[...], axis=0)       # (1, Fin)
    ss = jnp.sum(ss_part_ref[...], axis=0)     # (1, Fin)
    mu = s * inv_n
    var = jnp.maximum(ss * inv_n - mu * mu, 0.0)
    sc = g_ref[...] * lax.rsqrt(var + EPS)     # (1, Fin)
    sh = be_ref[...] - mu * sc                 # (1, Fin)
    return h_in_ref[...].astype(jnp.float32) * sc + sh


# --------------------------------------------------------------------------
# Kernel 1: h1 = relu(x @ W1 + b1) + per-tile partial stats.
# x arrives as raw f32; bf16 cast happens just before the MXU dot.
# --------------------------------------------------------------------------
def _layer1_kernel(x_ref, w_ref, b_ref, h_ref, s_ref, ss_ref,
                   *, tile_n, n_true, n_pad):
    i = pl.program_id(0)
    h = jnp.dot(x_ref[...].astype(jnp.bfloat16), w_ref[...],
                preferred_element_type=jnp.float32)
    h = jnp.maximum(h + b_ref[...], 0.0)                       # (tile_n, 64) f32
    _store_partial_stats(h, s_ref, ss_ref, i, tile_n, n_true, n_pad)
    h_ref[...] = h.astype(h_ref.dtype)


def _layer1(x, w, b, *, tile_n, n_true):
    n_pad, k = x.shape
    f = w.shape[1]
    t = n_pad // tile_n
    kernel = functools.partial(_layer1_kernel, tile_n=tile_n,
                               n_true=n_true, n_pad=n_pad)
    return pl.pallas_call(
        kernel,
        grid=(t,),
        in_specs=[
            pl.BlockSpec((tile_n, k), lambda i: (i, 0)),   # streamed f32 x tile
            pl.BlockSpec((k, f), lambda i: (0, 0)),        # VMEM-resident weight
            pl.BlockSpec((1, f), lambda i: (0, 0)),        # VMEM-resident bias
        ],
        out_specs=[
            pl.BlockSpec((tile_n, f), lambda i: (i, 0)),   # bf16 activations
            pl.BlockSpec((1, 1, f), lambda i: (i, 0, 0)),  # per-tile sum
            pl.BlockSpec((1, 1, f), lambda i: (i, 0, 0)),  # per-tile sumsq
        ],
        out_shape=[
            jax.ShapeDtypeStruct((n_pad, f), jnp.bfloat16),
            jax.ShapeDtypeStruct((t, 1, f), jnp.float32),
            jax.ShapeDtypeStruct((t, 1, f), jnp.float32),
        ],
        compiler_params=pltpu.CompilerParams(
            dimension_semantics=("parallel",)),
    )(x, w, b)


# --------------------------------------------------------------------------
# Kernel 2: h2 = relu(BN1(h1) @ W2 + b2) + per-tile partial stats of h2.
# --------------------------------------------------------------------------
def _layer_mid_kernel(s_in_ref, ss_in_ref, g_ref, be_ref, h_in_ref, w_ref, b_ref,
                      h_ref, s_ref, ss_ref, *, tile_n, n_true, n_pad):
    i = pl.program_id(0)
    hn = _apply_bn(s_in_ref, ss_in_ref, g_ref, be_ref, h_in_ref, n_true)
    h = jnp.dot(hn.astype(jnp.bfloat16), w_ref[...],
                preferred_element_type=jnp.float32)
    h = jnp.maximum(h + b_ref[...], 0.0)                       # (tile_n, 32) f32
    _store_partial_stats(h, s_ref, ss_ref, i, tile_n, n_true, n_pad)
    h_ref[...] = h.astype(h_ref.dtype)


def _layer_mid(s_in, ss_in, g, be, h_in, w, b, *, tile_n, n_true):
    n_pad, fin = h_in.shape
    fout = w.shape[1]
    t_in = s_in.shape[0]
    t = n_pad // tile_n
    kernel = functools.partial(_layer_mid_kernel, tile_n=tile_n,
                               n_true=n_true, n_pad=n_pad)
    return pl.pallas_call(
        kernel,
        grid=(t,),
        in_specs=[
            pl.BlockSpec((t_in, 1, fin), lambda i: (0, 0, 0)),   # layer-1 partials
            pl.BlockSpec((t_in, 1, fin), lambda i: (0, 0, 0)),
            pl.BlockSpec((1, fin), lambda i: (0, 0)),            # gamma
            pl.BlockSpec((1, fin), lambda i: (0, 0)),            # beta
            pl.BlockSpec((tile_n, fin), lambda i: (i, 0)),       # streamed h1 tile
            pl.BlockSpec((fin, fout), lambda i: (0, 0)),         # weight
            pl.BlockSpec((1, fout), lambda i: (0, 0)),           # bias
        ],
        out_specs=[
            pl.BlockSpec((tile_n, fout), lambda i: (i, 0)),
            pl.BlockSpec((1, 1, fout), lambda i: (i, 0, 0)),
            pl.BlockSpec((1, 1, fout), lambda i: (i, 0, 0)),
        ],
        out_shape=[
            jax.ShapeDtypeStruct((n_pad, fout), jnp.bfloat16),
            jax.ShapeDtypeStruct((t, 1, fout), jnp.float32),
            jax.ShapeDtypeStruct((t, 1, fout), jnp.float32),
        ],
        compiler_params=pltpu.CompilerParams(
            dimension_semantics=("parallel",)),
    )(s_in, ss_in, g, be, h_in, w, b)


# --------------------------------------------------------------------------
# Kernel 3: out = log_softmax(BN2(h2) @ W3 + b3), written directly as (N, 10).
# --------------------------------------------------------------------------
def _layer_out_kernel(s_in_ref, ss_in_ref, g_ref, be_ref, h_in_ref, w_ref, b_ref,
                      out_ref, *, n_true):
    hn = _apply_bn(s_in_ref, ss_in_ref, g_ref, be_ref, h_in_ref, n_true)
    logits = jnp.dot(hn.astype(jnp.bfloat16), w_ref[...],
                     preferred_element_type=jnp.float32)
    logits = logits + b_ref[...]                                # (tile_n, 10) f32
    m = jnp.max(logits, axis=1, keepdims=True)
    z = logits - m
    lse = jnp.log(jnp.sum(jnp.exp(z), axis=1, keepdims=True))
    out_ref[...] = z - lse


def _layer_out(s_in, ss_in, g, be, h_in, w, b, *, tile_n, n_true):
    n_pad, fin = h_in.shape
    fout = w.shape[1]
    t_in = s_in.shape[0]
    t = n_pad // tile_n
    kernel = functools.partial(_layer_out_kernel, n_true=n_true)
    return pl.pallas_call(
        kernel,
        grid=(t,),
        in_specs=[
            pl.BlockSpec((t_in, 1, fin), lambda i: (0, 0, 0)),
            pl.BlockSpec((t_in, 1, fin), lambda i: (0, 0, 0)),
            pl.BlockSpec((1, fin), lambda i: (0, 0)),
            pl.BlockSpec((1, fin), lambda i: (0, 0)),
            pl.BlockSpec((tile_n, fin), lambda i: (i, 0)),
            pl.BlockSpec((fin, fout), lambda i: (0, 0)),
            pl.BlockSpec((1, fout), lambda i: (0, 0)),
        ],
        out_specs=pl.BlockSpec((tile_n, fout), lambda i: (i, 0)),
        out_shape=jax.ShapeDtypeStruct((n_pad, fout), jnp.float32),
        compiler_params=pltpu.CompilerParams(
            dimension_semantics=("parallel",)),
    )(s_in, ss_in, g, be, h_in, w, b)


# --------------------------------------------------------------------------
# Forward
# --------------------------------------------------------------------------
def _mlp_forward(x_nchw, params):
    """x_nchw: (N, 1, 28, 28) float32.  Returns (N, 10) log-probabilities."""
    (w1, b1, g1, be1, w2, b2, g2, be2, w3, b3) = params
    n = x_nchw.shape[0]

    x = x_nchw.reshape(n, -1)                       # (N, 784) f32, no K padding
    n_pad = _round_up(n, 16)
    if n_pad > n:                                   # tiny row pad only when needed
        x = jnp.pad(x, ((0, n_pad - n), (0, 0)))

    tile1 = _pick_tile(n_pad, MAX_TILE1)            # x-heavy kernel
    tile2 = _pick_tile(n_pad, MAX_TILE2)            # small-activation kernels

    w1b = w1.astype(jnp.bfloat16)
    w2b = w2.astype(jnp.bfloat16)
    w3b = w3.astype(jnp.bfloat16)

    # ---- layer 1: Linear(784,64) + ReLU, per-tile batch-stat partials -------
    h1, s1p, ss1p = _layer1(x, w1b, b1, tile_n=tile1, n_true=n)

    # ---- layer 2: BN1 (in-kernel) -> Linear(64,32) + ReLU, partials ---------
    h2, s2p, ss2p = _layer_mid(s1p, ss1p, g1, be1, h1, w2b, b2,
                               tile_n=tile2, n_true=n)

    # ---- layer 3: BN2 (in-kernel) -> Linear(32,10) -> log_softmax -----------
    out = _layer_out(s2p, ss2p, g2, be2, h2, w3b, b3, tile_n=tile2, n_true=n)

    return out if n_pad == n else out[:n]


mlp_forward = jax.jit(_mlp_forward)


# --------------------------------------------------------------------------
# Parameter init (PyTorch-like, stored as (in, out)) and f32 JAX reference
# --------------------------------------------------------------------------
def init_params(key):
    k1, k2, k3, k4, k5, k6 = jax.random.split(key, 6)

    def linear(kw, kb, fan_in, fan_out):
        bound = 1.0 / jnp.sqrt(jnp.float32(fan_in))
        w = jax.random.uniform(kw, (fan_in, fan_out), jnp.float32, -bound, bound)
        b = jax.random.uniform(kb, (1, fan_out), jnp.float32, -bound, bound)
        return w, b

    w1, b1 = linear(k1, k2, 784, 64)
    w2, b2 = linear(k3, k4, 64, 32)
    w3, b3 = linear(k5, k6, 32, 10)
    g1, be1 = jnp.ones((1, 64), jnp.float32), jnp.zeros((1, 64), jnp.float32)
    g2, be2 = jnp.ones((1, 32), jnp.float32), jnp.zeros((1, 32), jnp.float32)
    return (w1, b1, g1, be1, w2, b2, g2, be2, w3, b3)


def mlp_reference(x_nchw, params):
    (w1, b1, g1, be1, w2, b2, g2, be2, w3, b3) = params
    x = x_nchw.reshape(x_nchw.shape[0], -1).astype(jnp.float32)

    def bn(h, g, be):
        mu = jnp.mean(h, axis=0, keepdims=True)
        var = jnp.mean((h - mu) ** 2, axis=0, keepdims=True)
        return (h - mu) * lax.rsqrt(var + EPS) * g + be

    h = bn(jnp.maximum(x @ w1 + b1, 0.0), g1, be1)
    h = bn(jnp.maximum(h @ w2 + b2, 0.0), g2, be2)
    logits = h @ w3 + b3
    return jax.nn.log_softmax(logits, axis=1)


if __name__ == "__main__":
    key = jax.random.PRNGKey(0)
    kx, kp = jax.random.split(key)

    batch = 8
    x = jax.random.normal(kx, (batch, 1, 28, 28), jnp.float32)   # NCHW MNIST-shaped
    params = init_params(kp)

    out = jax.block_until_ready(mlp_forward(x, params))

    assert out.shape == (batch, 10)
    assert out.dtype == jnp.float32
    assert bool(jnp.all(jnp.isfinite(out)))
    # log_softmax rows must exponentiate-sum to 1
    assert jnp.allclose(jnp.sum(jnp.exp(out), axis=1), 1.0, atol=1e-3)
    # matches the f32 reference up to bf16-input rounding
    ref = mlp_reference(x, params)
    assert jnp.allclose(out, ref, atol=1e-1)

    print("KERNEL_OK")
</pallas_src>

<mosaic_0001>
module attributes {stable_mosaic.version = 11 : i64} {
  func.func @_layer1_kernel(%arg0: i32, %arg1: memref<16x784xf32, #tpu.memory_space<vmem>>, %arg2: memref<784x64xbf16, #tpu.memory_space<vmem>>, %arg3: memref<1x64xf32, #tpu.memory_space<vmem>>, %arg4: memref<16x64xbf16, #tpu.memory_space<vmem>>, %arg5: memref<1x1x64xf32, #tpu.memory_space<vmem>>, %arg6: memref<1x1x64xf32, #tpu.memory_space<vmem>>) attributes {dimension_semantics = [#tpu.dimension_semantics<parallel>], iteration_bounds = array<i64: 1>, scalar_prefetch = 0 : i64, scratch_operands = 0 : i64, tpu.core_type = #tpu.core_type<tc>, window_params = [{transform_indices = @transform_0, window_bounds = array<i64: 16, 784>}, {pipeline_mode = #tpu.pipeline_mode<synchronous>, transform_indices = @transform_1, window_bounds = array<i64: 784, 64>}, {pipeline_mode = #tpu.pipeline_mode<synchronous>, transform_indices = @transform_2, window_bounds = array<i64: 1, 64>}, {transform_indices = @transform_3, window_bounds = array<i64: 16, 64>}, {transform_indices = @transform_4, window_bounds = array<i64: 1, 1, 64>}, {transform_indices = @transform_5, window_bounds = array<i64: 1, 1, 64>}]} {
    %c0 = arith.constant 0 : index
    %c0_0 = arith.constant 0 : index
    %0 = vector.load %arg1[%c0, %c0_0] : memref<16x784xf32, #tpu.memory_space<vmem>>, vector<16x784xf32>
    %1 = arith.truncf %0 : vector<16x784xf32> to vector<16x784xbf16>
    %c0_1 = arith.constant 0 : index
    %c0_2 = arith.constant 0 : index
    %2 = vector.load %arg2[%c0_1, %c0_2] : memref<784x64xbf16, #tpu.memory_space<vmem>>, vector<784x64xbf16>
    %cst = arith.constant dense<0.000000e+00> : vector<16x64xf32>
    %3 = tpu.matmul %1, %2, %cst {dimension_numbers = #tpu.dot_dimension_numbers<[1], [0], [0], [1], [0, 0, 1, 1], [], []>} : vector<16x784xbf16>, vector<784x64xbf16>, vector<16x64xf32> -> vector<16x64xf32>
    %c0_3 = arith.constant 0 : index
    %c0_4 = arith.constant 0 : index
    %4 = vector.load %arg3[%c0_3, %c0_4] : memref<1x64xf32, #tpu.memory_space<vmem>>, vector<1x64xf32>
    %5 = vector.broadcast %4 : vector<1x64xf32> to vector<16x64xf32>
    %6 = arith.addf %3, %5 : vector<16x64xf32>
    %cst_5 = arith.constant 0.000000e+00 : f32
    %7 = vector.broadcast %cst_5 : f32 to vector<16x64xf32>
    %8 = arith.maximumf %6, %7 : vector<16x64xf32>
    %c1_i32 = arith.constant 1 : i32
    %9 = arith.addi %arg0, %c1_i32 : i32
    %c16_i32 = arith.constant 16 : i32
    %10 = arith.muli %9, %c16_i32 : i32
    %c8_i32 = arith.constant 8 : i32
    %11 = arith.cmpi sgt, %10, %c8_i32 : i32
    %true = arith.constant true
    %12 = arith.xori %11, %true : i1
    %13 = arith.extui %12 : i1 to i32
    %c0_i32 = arith.constant 0 : i32
    %14 = arith.cmpi ne, %13, %c0_i32 : i32
    scf.if %14 {
      %cst_9 = arith.constant dense<0.000000e+00> : vector<64xf32>
      %19 = vector.multi_reduction <add>, %8, %cst_9 [0] : vector<16x64xf32> to vector<64xf32>
      %20 = vector.shape_cast %19 : vector<64xf32> to vector<1x64xf32>
      %21 = vector.shape_cast %20 : vector<1x64xf32> to vector<1x1x64xf32>
      %c0_10 = arith.constant 0 : index
      %c0_11 = arith.constant 0 : index
      %c0_12 = arith.constant 0 : index
      %22 = vector.load %arg5[%c0_10, %c0_11, %c0_12] : memref<1x1x64xf32, #tpu.memory_space<vmem>>, vector<1x1x64xf32>
      tpu.vector_store %arg5[%c0_10, %c0_11, %c0_12], %21 {strides = array<i32>} : memref<1x1x64xf32, #tpu.memory_space<vmem>>, vector<1x1x64xf32>,
      %23 = arith.mulf %8, %8 : vector<16x64xf32>
      %cst_13 = arith.constant dense<0.000000e+00> : vector<64xf32>
      %24 = vector.multi_reduction <add>, %23, %cst_13 [0] : vector<16x64xf32> to vector<64xf32>
      %25 = vector.shape_cast %24 : vector<64xf32> to vector<1x64xf32>
      %26 = vector.shape_cast %25 : vector<1x64xf32> to vector<1x1x64xf32>
      %c0_14 = arith.constant 0 : index
      %c0_15 = arith.constant 0 : index
      %c0_16 = arith.constant 0 : index
      %27 = vector.load %arg6[%c0_14, %c0_15, %c0_16] : memref<1x1x64xf32, #tpu.memory_space<vmem>>, vector<1x1x64xf32>
      tpu.vector_store %arg6[%c0_14, %c0_15, %c0_16], %26 {strides = array<i32>} : memref<1x1x64xf32, #tpu.memory_space<vmem>>, vector<1x1x64xf32>,
    } else {
    }
    %15 = arith.extui %11 : i1 to i32
    %c0_i32_6 = arith.constant 0 : i32
    %16 = arith.cmpi ne, %15, %c0_i32_6 : i32
    scf.if %16 {
      %c16_i32_9 = arith.constant 16 : i32
      %19 = arith.muli %arg0, %c16_i32_9 : i32
      %20 = tpu.iota {dimensions = array<i32: 0>} : vector<16x64xi32>
      %21 = vector.broadcast %19 : i32 to vector<16x64xi32>
      %22 = arith.addi %21, %20 : vector<16x64xi32>
      %c8_i32_10 = arith.constant 8 : i32
      %23 = vector.broadcast %c8_i32_10 : i32 to vector<16x64xi32>
      %24 = arith.cmpi slt, %22, %23 : vector<16x64xi32>
      %cst_11 = arith.constant 0.000000e+00 : f32
      %25 = vector.broadcast %cst_11 : f32 to vector<16x64xf32>
      %26 = arith.select %24, %8, %25 : vector<16x64xi1>, vector<16x64xf32>
      %cst_12 = arith.constant dense<0.000000e+00> : vector<64xf32>
      %27 = vector.multi_reduction <add>, %26, %cst_12 [0] : vector<16x64xf32> to vector<64xf32>
      %28 = vector.shape_cast %27 : vector<64xf32> to vector<1x64xf32>
      %29 = vector.shape_cast %28 : vector<1x64xf32> to vector<1x1x64xf32>
      %c0_13 = arith.constant 0 : index
      %c0_14 = arith.constant 0 : index
      %c0_15 = arith.constant 0 : index
      %30 = vector.load %arg5[%c0_13, %c0_14, %c0_15] : memref<1x1x64xf32, #tpu.memory_space<vmem>>, vector<1x1x64xf32>
      tpu.vector_store %arg5[%c0_13, %c0_14, %c0_15], %29 {strides = array<i32>} : memref<1x1x64xf32, #tpu.memory_space<vmem>>, vector<1x1x64xf32>,
      %31 = arith.mulf %26, %26 : vector<16x64xf32>
      %cst_16 = arith.constant dense<0.000000e+00> : vector<64xf32>
      %32 = vector.multi_reduction <add>, %31, %cst_16 [0] : vector<16x64xf32> to vector<64xf32>
      %33 = vector.shape_cast %32 : vector<64xf32> to vector<1x64xf32>
      %34 = vector.shape_cast %33 : vector<1x64xf32> to vector<1x1x64xf32>
      %c0_17 = arith.constant 0 : index
      %c0_18 = arith.constant 0 : index
      %c0_19 = arith.constant 0 : index
      %35 = vector.load %arg6[%c0_17, %c0_18, %c0_19] : memref<1x1x64xf32, #tpu.memory_space<vmem>>, vector<1x1x64xf32>
      tpu.vector_store %arg6[%c0_17, %c0_18, %c0_19], %34 {strides = array<i32>} : memref<1x1x64xf32, #tpu.memory_space<vmem>>, vector<1x1x64xf32>,
    } else {
    }
    %17 = arith.truncf %8 : vector<16x64xf32> to vector<16x64xbf16>
    %c0_7 = arith.constant 0 : index
    %c0_8 = arith.constant 0 : index
    %18 = vector.load %arg4[%c0_7, %c0_8] : memref<16x64xbf16, #tpu.memory_space<vmem>>, vector<16x64xbf16>
    tpu.vector_store %arg4[%c0_7, %c0_8], %17 {strides = array<i32>} : memref<16x64xbf16, #tpu.memory_space<vmem>>, vector<16x64xbf16>,
    return
  }
  func.func @transform_0(%arg0: i32) -> (i32, i32) {
    %c0_i32 = arith.constant 0 : i32
    %c0_i32_0 = arith.constant 0 : i32
    return %arg0, %c0_i32 : i32, i32
  }
  func.func @transform_1(%arg0: i32) -> (i32, i32) {
    %c0_i32 = arith.constant 0 : i32
    %c0_i32_0 = arith.constant 0 : i32
    %c0_i32_1 = arith.constant 0 : i32
    return %c0_i32, %c0_i32_0 : i32, i32
  }
  func.func @transform_2(%arg0: i32) -> (i32, i32) {
    %c0_i32 = arith.constant 0 : i32
    %c0_i32_0 = arith.constant 0 : i32
    %c0_i32_1 = arith.constant 0 : i32
    return %c0_i32, %c0_i32_0 : i32, i32
  }
  func.func @transform_3(%arg0: i32) -> (i32, i32) {
    %c0_i32 = arith.constant 0 : i32
    %c0_i32_0 = arith.constant 0 : i32
    return %arg0, %c0_i32 : i32, i32
  }
  func.func @transform_4(%arg0: i32) -> (i32, i32, i32) {
    %c0_i32 = arith.constant 0 : i32
    %c0_i32_0 = arith.constant 0 : i32
    %c0_i32_1 = arith.constant 0 : i32
    return %arg0, %c0_i32, %c0_i32_0 : i32, i32, i32
  }
  func.func @transform_5(%arg0: i32) -> (i32, i32, i32) {
    %c0_i32 = arith.constant 0 : i32
    %c0_i32_0 = arith.constant 0 : i32
    %c0_i32_1 = arith.constant 0 : i32
    return %arg0, %c0_i32, %c0_i32_0 : i32, i32, i32
  }
}

module attributes {stable_mosaic.version = 11 : i64} {
  func.func @_layer_mid_kernel(%arg0: i32, %arg1: memref<1x1x64xf32, #tpu.memory_space<vmem>>, %arg2: memref<1x1x64xf32, #tpu.memory_space<vmem>>, %arg3: memref<1x64xf32, #tpu.memory_space<vmem>>, %arg4: memref<1x64xf32, #tpu.memory_space<vmem>>, %arg5: memref<16x64xbf16, #tpu.memory_space<vmem>>, %arg6: memref<64x32xbf16, #tpu.memory_space<vmem>>, %arg7: memref<1x32xf32, #tpu.memory_space<vmem>>, %arg8: memref<16x32xbf16, #tpu.memory_space<vmem>>, %arg9: memref<1x1x32xf32, #tpu.memory_space<vmem>>, %arg10: memref<1x1x32xf32, #tpu.memory_space<vmem>>) attributes {dimension_semantics = [#tpu.dimension_semantics<parallel>], iteration_bounds = array<i64: 1>, scalar_prefetch = 0 : i64, scratch_operands = 0 : i64, tpu.core_type = #tpu.core_type<tc>, window_params = [{pipeline_mode = #tpu.pipeline_mode<synchronous>, transform_indices = @transform_0, window_bounds = array<i64: 1, 1, 64>}, {pipeline_mode = #tpu.pipeline_mode<synchronous>, transform_indices = @transform_1, window_bounds = array<i64: 1, 1, 64>}, {pipeline_mode = #tpu.pipeline_mode<synchronous>, transform_indices = @transform_2, window_bounds = array<i64: 1, 64>}, {pipeline_mode = #tpu.pipeline_mode<synchronous>, transform_indices = @transform_3, window_bounds = array<i64: 1, 64>}, {transform_indices = @transform_4, window_bounds = array<i64: 16, 64>}, {pipeline_mode = #tpu.pipeline_mode<synchronous>, transform_indices = @transform_5, window_bounds = array<i64: 64, 32>}, {pipeline_mode = #tpu.pipeline_mode<synchronous>, transform_indices = @transform_6, window_bounds = array<i64: 1, 32>}, {transform_indices = @transform_7, window_bounds = array<i64: 16, 32>}, {transform_indices = @transform_8, window_bounds = array<i64: 1, 1, 32>}, {transform_indices = @transform_9, window_bounds = array<i64: 1, 1, 32>}]} {
    %c0 = arith.constant 0 : index
    %c0_0 = arith.constant 0 : index
    %c0_1 = arith.constant 0 : index
    %0 = vector.load %arg1[%c0, %c0_0, %c0_1] : memref<1x1x64xf32, #tpu.memory_space<vmem>>, vector<1x1x64xf32>
    %cst = arith.constant dense<0.000000e+00> : vector<1x64xf32>
    %1 = vector.multi_reduction <add>, %0, %cst [0] : vector<1x1x64xf32> to vector<1x64xf32>
    %c0_2 = arith.constant 0 : index
    %c0_3 = arith.constant 0 : index
    %c0_4 = arith.constant 0 : index
    %2 = vector.load %arg2[%c0_2, %c0_3, %c0_4] : memref<1x1x64xf32, #tpu.memory_space<vmem>>, vector<1x1x64xf32>
    %cst_5 = arith.constant dense<0.000000e+00> : vector<1x64xf32>
    %3 = vector.multi_reduction <add>, %2, %cst_5 [0] : vector<1x1x64xf32> to vector<1x64xf32>
    %cst_6 = arith.constant 1.250000e-01 : f32
    %4 = vector.broadcast %cst_6 : f32 to vector<1x64xf32>
    %5 = arith.mulf %1, %4 : vector<1x64xf32>
    %cst_7 = arith.constant 1.250000e-01 : f32
    %6 = vector.broadcast %cst_7 : f32 to vector<1x64xf32>
    %7 = arith.mulf %3, %6 : vector<1x64xf32>
    %8 = arith.mulf %5, %5 : vector<1x64xf32>
    %9 = arith.subf %7, %8 : vector<1x64xf32>
    %cst_8 = arith.constant 0.000000e+00 : f32
    %10 = vector.broadcast %cst_8 : f32 to vector<1x64xf32>
    %11 = arith.maximumf %9, %10 : vector<1x64xf32>
    %c0_9 = arith.constant 0 : index
    %c0_10 = arith.constant 0 : index
    %12 = vector.load %arg3[%c0_9, %c0_10] : memref<1x64xf32, #tpu.memory_space<vmem>>, vector<1x64xf32>
    %cst_11 = arith.constant 9.99999974E-6 : f32
    %13 = vector.broadcast %cst_11 : f32 to vector<1x64xf32>
    %14 = arith.addf %11, %13 : vector<1x64xf32>
    %15 = math.rsqrt %14 : vector<1x64xf32>
    %16 = arith.mulf %12, %15 : vector<1x64xf32>
    %c0_12 = arith.constant 0 : index
    %c0_13 = arith.constant 0 : index
    %17 = vector.load %arg4[%c0_12, %c0_13] : memref<1x64xf32, #tpu.memory_space<vmem>>, vector<1x64xf32>
    %18 = arith.mulf %5, %16 : vector<1x64xf32>
    %19 = arith.subf %17, %18 : vector<1x64xf32>
    %c0_14 = arith.constant 0 : index
    %c0_15 = arith.constant 0 : index
    %20 = vector.load %arg5[%c0_14, %c0_15] : memref<16x64xbf16, #tpu.memory_space<vmem>>, vector<16x64xbf16>
    %21 = arith.extf %20 : vector<16x64xbf16> to vector<16x64xf32>
    %22 = vector.broadcast %16 : vector<1x64xf32> to vector<16x64xf32>
    %23 = arith.mulf %21, %22 : vector<16x64xf32>
    %24 = vector.broadcast %19 : vector<1x64xf32> to vector<16x64xf32>
    %25 = arith.addf %23, %24 : vector<16x64xf32>
    %26 = arith.truncf %25 : vector<16x64xf32> to vector<16x64xbf16>
    %c0_16 = arith.constant 0 : index
    %c0_17 = arith.constant 0 : index
    %27 = vector.load %arg6[%c0_16, %c0_17] : memref<64x32xbf16, #tpu.memory_space<vmem>>, vector<64x32xbf16>
    %cst_18 = arith.constant dense<0.000000e+00> : vector<16x32xf32>
    %28 = tpu.matmul %26, %27, %cst_18 {dimension_numbers = #tpu.dot_dimension_numbers<[1], [0], [0], [1], [0, 0, 1, 1], [], []>} : vector<16x64xbf16>, vector<64x32xbf16>, vector<16x32xf32> -> vector<16x32xf32>
    %c0_19 = arith.constant 0 : index
    %c0_20 = arith.constant 0 : index
    %29 = vector.load %arg7[%c0_19, %c0_20] : memref<1x32xf32, #tpu.memory_space<vmem>>, vector<1x32xf32>
    %30 = vector.broadcast %29 : vector<1x32xf32> to vector<16x32xf32>
    %31 = arith.addf %28, %30 : vector<16x32xf32>
    %cst_21 = arith.constant 0.000000e+00 : f32
    %32 = vector.broadcast %cst_21 : f32 to vector<16x32xf32>
    %33 = arith.maximumf %31, %32 : vector<16x32xf32>
    %c1_i32 = arith.constant 1 : i32
    %34 = arith.addi %arg0, %c1_i32 : i32
    %c16_i32 = arith.constant 16 : i32
    %35 = arith.muli %34, %c16_i32 : i32
    %c8_i32 = arith.constant 8 : i32
    %36 = arith.cmpi sgt, %35, %c8_i32 : i32
    %true = arith.constant true
    %37 = arith.xori %36, %true : i1
    %38 = arith.extui %37 : i1 to i32
    %c0_i32 = arith.constant 0 : i32
    %39 = arith.cmpi ne, %38, %c0_i32 : i32
    scf.if %39 {
      %cst_25 = arith.constant dense<0.000000e+00> : vector<32xf32>
      %44 = vector.multi_reduction <add>, %33, %cst_25 [0] : vector<16x32xf32> to vector<32xf32>
      %45 = vector.shape_cast %44 : vector<32xf32> to vector<1x32xf32>
      %46 = vector.shape_cast %45 : vector<1x32xf32> to vector<1x1x32xf32>
      %c0_26 = arith.constant 0 : index
      %c0_27 = arith.constant 0 : index
      %c0_28 = arith.constant 0 : index
      %47 = vector.load %arg9[%c0_26, %c0_27, %c0_28] : memref<1x1x32xf32, #tpu.memory_space<vmem>>, vector<1x1x32xf32>
      tpu.vector_store %arg9[%c0_26, %c0_27, %c0_28], %46 {strides = array<i32>} : memref<1x1x32xf32, #tpu.memory_space<vmem>>, vector<1x1x32xf32>,
      %48 = arith.mulf %33, %33 : vector<16x32xf32>
      %cst_29 = arith.constant dense<0.000000e+00> : vector<32xf32>
      %49 = vector.multi_reduction <add>, %48, %cst_29 [0] : vector<16x32xf32> to vector<32xf32>
      %50 = vector.shape_cast %49 : vector<32xf32> to vector<1x32xf32>
      %51 = vector.shape_cast %50 : vector<1x32xf32> to vector<1x1x32xf32>
      %c0_30 = arith.constant 0 : index
      %c0_31 = arith.constant 0 : index
      %c0_32 = arith.constant 0 : index
      %52 = vector.load %arg10[%c0_30, %c0_31, %c0_32] : memref<1x1x32xf32, #tpu.memory_space<vmem>>, vector<1x1x32xf32>
      tpu.vector_store %arg10[%c0_30, %c0_31, %c0_32], %51 {strides = array<i32>} : memref<1x1x32xf32, #tpu.memory_space<vmem>>, vector<1x1x32xf32>,
    } else {
    }
    %40 = arith.extui %36 : i1 to i32
    %c0_i32_22 = arith.constant 0 : i32
    %41 = arith.cmpi ne, %40, %c0_i32_22 : i32
    scf.if %41 {
      %c16_i32_25 = arith.constant 16 : i32
      %44 = arith.muli %arg0, %c16_i32_25 : i32
      %45 = tpu.iota {dimensions = array<i32: 0>} : vector<16x32xi32>
      %46 = vector.broadcast %44 : i32 to vector<16x32xi32>
      %47 = arith.addi %46, %45 : vector<16x32xi32>
      %c8_i32_26 = arith.constant 8 : i32
      %48 = vector.broadcast %c8_i32_26 : i32 to vector<16x32xi32>
      %49 = arith.cmpi slt, %47, %48 : vector<16x32xi32>
      %cst_27 = arith.constant 0.000000e+00 : f32
      %50 = vector.broadcast %cst_27 : f32 to vector<16x32xf32>
      %51 = arith.select %49, %33, %50 : vector<16x32xi1>, vector<16x32xf32>
      %cst_28 = arith.constant dense<0.000000e+00> : vector<32xf32>
      %52 = vector.multi_reduction <add>, %51, %cst_28 [0] : vector<16x32xf32> to vector<32xf32>
      %53 = vector.shape_cast %52 : vector<32xf32> to vector<1x32xf32>
      %54 = vector.shape_cast %53 : vector<1x32xf32> to vector<1x1x32xf32>
      %c0_29 = arith.constant 0 : index
      %c0_30 = arith.constant 0 : index
      %c0_31 = arith.constant 0 : index
      %55 = vector.load %arg9[%c0_29, %c0_30, %c0_31] : memref<1x1x32xf32, #tpu.memory_space<vmem>>, vector<1x1x32xf32>
      tpu.vector_store %arg9[%c0_29, %c0_30, %c0_31], %54 {strides = array<i32>} : memref<1x1x32xf32, #tpu.memory_space<vmem>>, vector<1x1x32xf32>,
      %56 = arith.mulf %51, %51 : vector<16x32xf32>
      %cst_32 = arith.constant dense<0.000000e+00> : vector<32xf32>
      %57 = vector.multi_reduction <add>, %56, %cst_32 [0] : vector<16x32xf32> to vector<32xf32>
      %58 = vector.shape_cast %57 : vector<32xf32> to vector<1x32xf32>
      %59 = vector.shape_cast %58 : vector<1x32xf32> to vector<1x1x32xf32>
      %c0_33 = arith.constant 0 : index
      %c0_34 = arith.constant 0 : index
      %c0_35 = arith.constant 0 : index
      %60 = vector.load %arg10[%c0_33, %c0_34, %c0_35] : memref<1x1x32xf32, #tpu.memory_space<vmem>>, vector<1x1x32xf32>
      tpu.vector_store %arg10[%c0_33, %c0_34, %c0_35], %59 {strides = array<i32>} : memref<1x1x32xf32, #tpu.memory_space<vmem>>, vector<1x1x32xf32>,
    } else {
    }
    %42 = arith.truncf %33 : vector<16x32xf32> to vector<16x32xbf16>
    %c0_23 = arith.constant 0 : index
    %c0_24 = arith.constant 0 : index
    %43 = vector.load %arg8[%c0_23, %c0_24] : memref<16x32xbf16, #tpu.memory_space<vmem>>, vector<16x32xbf16>
    tpu.vector_store %arg8[%c0_23, %c0_24], %42 {strides = array<i32>} : memref<16x32xbf16, #tpu.memory_space<vmem>>, vector<16x32xbf16>,
    return
  }
  func.func @transform_0(%arg0: i32) -> (i32, i32, i32) {
    %c0_i32 = arith.constant 0 : i32
    %c0_i32_0 = arith.constant 0 : i32
    %c0_i32_1 = arith.constant 0 : i32
    %c0_i32_2 = arith.constant 0 : i32
    return %c0_i32, %c0_i32_0, %c0_i32_1 : i32, i32, i32
  }
  func.func @transform_1(%arg0: i32) -> (i32, i32, i32) {
    %c0_i32 = arith.constant 0 : i32
    %c0_i32_0 = arith.constant 0 : i32
    %c0_i32_1 = arith.constant 0 : i32
    %c0_i32_2 = arith.constant 0 : i32
    return %c0_i32, %c0_i32_0, %c0_i32_1 : i32, i32, i32
  }
  func.func @transform_2(%arg0: i32) -> (i32, i32) {
    %c0_i32 = arith.constant 0 : i32
    %c0_i32_0 = arith.constant 0 : i32
    %c0_i32_1 = arith.constant 0 : i32
    return %c0_i32, %c0_i32_0 : i32, i32
  }
  func.func @transform_3(%arg0: i32) -> (i32, i32) {
    %c0_i32 = arith.constant 0 : i32
    %c0_i32_0 = arith.constant 0 : i32
    %c0_i32_1 = arith.constant 0 : i32
    return %c0_i32, %c0_i32_0 : i32, i32
  }
  func.func @transform_4(%arg0: i32) -> (i32, i32) {
    %c0_i32 = arith.constant 0 : i32
    %c0_i32_0 = arith.constant 0 : i32
    return %arg0, %c0_i32 : i32, i32
  }
  func.func @transform_5(%arg0: i32) -> (i32, i32) {
    %c0_i32 = arith.constant 0 : i32
    %c0_i32_0 = arith.constant 0 : i32
    %c0_i32_1 = arith.constant 0 : i32
    return %c0_i32, %c0_i32_0 : i32, i32
  }
  func.func @transform_6(%arg0: i32) -> (i32, i32) {
    %c0_i32 = arith.constant 0 : i32
    %c0_i32_0 = arith.constant 0 : i32
    %c0_i32_1 = arith.constant 0 : i32
    return %c0_i32, %c0_i32_0 : i32, i32
  }
  func.func @transform_7(%arg0: i32) -> (i32, i32) {
    %c0_i32 = arith.constant 0 : i32
    %c0_i32_0 = arith.constant 0 : i32
    return %arg0, %c0_i32 : i32, i32
  }
  func.func @transform_8(%arg0: i32) -> (i32, i32, i32) {
    %c0_i32 = arith.constant 0 : i32
    %c0_i32_0 = arith.constant 0 : i32
    %c0_i32_1 = arith.constant 0 : i32
    return %arg0, %c0_i32, %c0_i32_0 : i32, i32, i32
  }
  func.func @transform_9(%arg0: i32) -> (i32, i32, i32) {
    %c0_i32 = arith.constant 0 : i32
    %c0_i32_0 = arith.constant 0 : i32
    %c0_i32_1 = arith.constant 0 : i32
    return %arg0, %c0_i32, %c0_i32_0 : i32, i32, i32
  }
}

module attributes {stable_mosaic.version = 11 : i64} {
  func.func @_layer_out_kernel(%arg0: i32, %arg1: memref<1x1x32xf32, #tpu.memory_space<vmem>>, %arg2: memref<1x1x32xf32, #tpu.memory_space<vmem>>, %arg3: memref<1x32xf32, #tpu.memory_space<vmem>>, %arg4: memref<1x32xf32, #tpu.memory_space<vmem>>, %arg5: memref<16x32xbf16, #tpu.memory_space<vmem>>, %arg6: memref<32x10xbf16, #tpu.memory_space<vmem>>, %arg7: memref<1x10xf32, #tpu.memory_space<vmem>>, %arg8: memref<16x10xf32, #tpu.memory_space<vmem>>) attributes {dimension_semantics = [#tpu.dimension_semantics<parallel>], iteration_bounds = array<i64: 1>, scalar_prefetch = 0 : i64, scratch_operands = 0 : i64, tpu.core_type = #tpu.core_type<tc>, window_params = [{pipeline_mode = #tpu.pipeline_mode<synchronous>, transform_indices = @transform_0, window_bounds = array<i64: 1, 1, 32>}, {pipeline_mode = #tpu.pipeline_mode<synchronous>, transform_indices = @transform_1, window_bounds = array<i64: 1, 1, 32>}, {pipeline_mode = #tpu.pipeline_mode<synchronous>, transform_indices = @transform_2, window_bounds = array<i64: 1, 32>}, {pipeline_mode = #tpu.pipeline_mode<synchronous>, transform_indices = @transform_3, window_bounds = array<i64: 1, 32>}, {transform_indices = @transform_4, window_bounds = array<i64: 16, 32>}, {pipeline_mode = #tpu.pipeline_mode<synchronous>, transform_indices = @transform_5, window_bounds = array<i64: 32, 10>}, {pipeline_mode = #tpu.pipeline_mode<synchronous>, transform_indices = @transform_6, window_bounds = array<i64: 1, 10>}, {transform_indices = @transform_7, window_bounds = array<i64: 16, 10>}]} {
    %c0 = arith.constant 0 : index
    %c0_0 = arith.constant 0 : index
    %c0_1 = arith.constant 0 : index
    %0 = vector.load %arg1[%c0, %c0_0, %c0_1] : memref<1x1x32xf32, #tpu.memory_space<vmem>>, vector<1x1x32xf32>
    %cst = arith.constant dense<0.000000e+00> : vector<1x32xf32>
    %1 = vector.multi_reduction <add>, %0, %cst [0] : vector<1x1x32xf32> to vector<1x32xf32>
    %c0_2 = arith.constant 0 : index
    %c0_3 = arith.constant 0 : index
    %c0_4 = arith.constant 0 : index
    %2 = vector.load %arg2[%c0_2, %c0_3, %c0_4] : memref<1x1x32xf32, #tpu.memory_space<vmem>>, vector<1x1x32xf32>
    %cst_5 = arith.constant dense<0.000000e+00> : vector<1x32xf32>
    %3 = vector.multi_reduction <add>, %2, %cst_5 [0] : vector<1x1x32xf32> to vector<1x32xf32>
    %cst_6 = arith.constant 1.250000e-01 : f32
    %4 = vector.broadcast %cst_6 : f32 to vector<1x32xf32>
    %5 = arith.mulf %1, %4 : vector<1x32xf32>
    %cst_7 = arith.constant 1.250000e-01 : f32
    %6 = vector.broadcast %cst_7 : f32 to vector<1x32xf32>
    %7 = arith.mulf %3, %6 : vector<1x32xf32>
    %8 = arith.mulf %5, %5 : vector<1x32xf32>
    %9 = arith.subf %7, %8 : vector<1x32xf32>
    %cst_8 = arith.constant 0.000000e+00 : f32
    %10 = vector.broadcast %cst_8 : f32 to vector<1x32xf32>
    %11 = arith.maximumf %9, %10 : vector<1x32xf32>
    %c0_9 = arith.constant 0 : index
    %c0_10 = arith.constant 0 : index
    %12 = vector.load %arg3[%c0_9, %c0_10] : memref<1x32xf32, #tpu.memory_space<vmem>>, vector<1x32xf32>
    %cst_11 = arith.constant 9.99999974E-6 : f32
    %13 = vector.broadcast %cst_11 : f32 to vector<1x32xf32>
    %14 = arith.addf %11, %13 : vector<1x32xf32>
    %15 = math.rsqrt %14 : vector<1x32xf32>
    %16 = arith.mulf %12, %15 : vector<1x32xf32>
    %c0_12 = arith.constant 0 : index
    %c0_13 = arith.constant 0 : index
    %17 = vector.load %arg4[%c0_12, %c0_13] : memref<1x32xf32, #tpu.memory_space<vmem>>, vector<1x32xf32>
    %18 = arith.mulf %5, %16 : vector<1x32xf32>
    %19 = arith.subf %17, %18 : vector<1x32xf32>
    %c0_14 = arith.constant 0 : index
    %c0_15 = arith.constant 0 : index
    %20 = vector.load %arg5[%c0_14, %c0_15] : memref<16x32xbf16, #tpu.memory_space<vmem>>, vector<16x32xbf16>
    %21 = arith.extf %20 : vector<16x32xbf16> to vector<16x32xf32>
    %22 = vector.broadcast %16 : vector<1x32xf32> to vector<16x32xf32>
    %23 = arith.mulf %21, %22 : vector<16x32xf32>
    %24 = vector.broadcast %19 : vector<1x32xf32> to vector<16x32xf32>
    %25 = arith.addf %23, %24 : vector<16x32xf32>
    %26 = arith.truncf %25 : vector<16x32xf32> to vector<16x32xbf16>
    %c0_16 = arith.constant 0 : index
    %c0_17 = arith.constant 0 : index
    %27 = vector.load %arg6[%c0_16, %c0_17] : memref<32x10xbf16, #tpu.memory_space<vmem>>, vector<32x10xbf16>
    %cst_18 = arith.constant dense<0.000000e+00> : vector<16x10xf32>
    %28 = tpu.matmul %26, %27, %cst_18 {dimension_numbers = #tpu.dot_dimension_numbers<[1], [0], [0], [1], [0, 0, 1, 1], [], []>} : vector<16x32xbf16>, vector<32x10xbf16>, vector<16x10xf32> -> vector<16x10xf32>
    %c0_19 = arith.constant 0 : index
    %c0_20 = arith.constant 0 : index
    %29 = vector.load %arg7[%c0_19, %c0_20] : memref<1x10xf32, #tpu.memory_space<vmem>>, vector<1x10xf32>
    %30 = vector.broadcast %29 : vector<1x10xf32> to vector<16x10xf32>
    %31 = arith.addf %28, %30 : vector<16x10xf32>
    %cst_21 = arith.constant dense<0xFF800000> : vector<16xf32>
    %32 = vector.multi_reduction <maximumf>, %31, %cst_21 [1] : vector<16x10xf32> to vector<16xf32>
    %33 = vector.shape_cast %32 : vector<16xf32> to vector<16x1xf32>
    %34 = vector.broadcast %33 : vector<16x1xf32> to vector<16x10xf32>
    %35 = arith.subf %31, %34 : vector<16x10xf32>
    %36 = math.exp %35 : vector<16x10xf32>
    %cst_22 = arith.constant dense<0.000000e+00> : vector<16xf32>
    %37 = vector.multi_reduction <add>, %36, %cst_22 [1] : vector<16x10xf32> to vector<16xf32>
    %38 = vector.shape_cast %37 : vector<16xf32> to vector<16x1xf32>
    %39 = math.log %38 : vector<16x1xf32>
    %40 = vector.broadcast %39 : vector<16x1xf32> to vector<16x10xf32>
    %41 = arith.subf %35, %40 : vector<16x10xf32>
    %c0_23 = arith.constant 0 : index
    %c0_24 = arith.constant 0 : index
    %42 = vector.load %arg8[%c0_23, %c0_24] : memref<16x10xf32, #tpu.memory_space<vmem>>, vector<16x10xf32>
    tpu.vector_store %arg8[%c0_23, %c0_24], %41 {strides = array<i32>} : memref<16x10xf32, #tpu.memory_space<vmem>>, vector<16x10xf32>,
    return
  }
  func.func @transform_0(%arg0: i32) -> (i32, i32, i32) {
    %c0_i32 = arith.constant 0 : i32
    %c0_i32_0 = arith.constant 0 : i32
    %c0_i32_1 = arith.constant 0 : i32
    %c0_i32_2 = arith.constant 0 : i32
    return %c0_i32, %c0_i32_0, %c0_i32_1 : i32, i32, i32
  }
  func.func @transform_1(%arg0: i32) -> (i32, i32, i32) {
    %c0_i32 = arith.constant 0 : i32
    %c0_i32_0 = arith.constant 0 : i32
    %c0_i32_1 = arith.constant 0 : i32
    %c0_i32_2 = arith.constant 0 : i32
    return %c0_i32, %c0_i32_0, %c0_i32_1 : i32, i32, i32
  }
  func.func @transform_2(%arg0: i32) -> (i32, i32) {
    %c0_i32 = arith.constant 0 : i32
    %c0_i32_0 = arith.constant 0 : i32
    %c0_i32_1 = arith.constant 0 : i32
    return %c0_i32, %c0_i32_0 : i32, i32
  }
  func.func @transform_3(%arg0: i32) -> (i32, i32) {
    %c0_i32 = arith.constant 0 : i32
    %c0_i32_0 = arith.constant 0 : i32
    %c0_i32_1 = arith.constant 0 : i32
    return %c0_i32, %c0_i32_0 : i32, i32
  }
  func.func @transform_4(%arg0: i32) -> (i32, i32) {
    %c0_i32 = arith.constant 0 : i32
    %c0_i32_0 = arith.constant 0 : i32
    return %arg0, %c0_i32 : i32, i32
  }
  func.func @transform_5(%arg0: i32) -> (i32, i32) {
    %c0_i32 = arith.constant 0 : i32
    %c0_i32_0 = arith.constant 0 : i32
    %c0_i32_1 = arith.constant 0 : i32
    return %c0_i32, %c0_i32_0 : i32, i32
  }
  func.func @transform_6(%arg0: i32) -> (i32, i32) {
    %c0_i32 = arith.constant 0 : i32
    %c0_i32_0 = arith.constant 0 : i32
    %c0_i32_1 = arith.constant 0 : i32
    return %c0_i32, %c0_i32_0 : i32, i32
  }
  func.func @transform_7(%arg0: i32) -> (i32, i32) {
    %c0_i32 = arith.constant 0 : i32
    %c0_i32_0 = arith.constant 0 : i32
    return %arg0, %c0_i32 : i32, i32
  }
}

</mosaic_0001>

<llo_original>
// kernel: _mlp_forward.4
$region0: #{_mlp_forward.4}
  #allocation0 [shape = 'u32[]', space=smem, size = 0x4, offset = 0x4, fixed_abs, tag = 'smem constant byte address 0x4 - core index']
  #allocation1 [shape = 'u32[144,128]{1,0:T(1,128)}', space=vmem, size = 0x12000, scoped, tag = 'internal scratch']
  %s0 = inlined_call_operand.vmem [shape: f32[1,1,64], index: 0, kind: input, shape index: {}]
  %s1 = inlined_call_operand.vmem [shape: f32[1,1,64], index: 1, kind: input, shape index: {}]
  %s2 = inlined_call_operand.vmem [shape: f32[1,64], index: 2, kind: input, shape index: {}]
  %s3 = inlined_call_operand.vmem [shape: f32[1,64], index: 3, kind: input, shape index: {}]
  %s4 = inlined_call_operand.vmem [shape: bf16[16,64], index: 4, kind: input, shape index: {}]
  %s5 = inlined_call_operand.vmem [shape: bf16[64,32], index: 5, kind: input, shape index: {}]
  %s6 = inlined_call_operand.vmem [shape: f32[1,32], index: 6, kind: input, shape index: {}]
  %s7 = inlined_call_operand.vmem [shape: bf16[16,32], index: 7, kind: output, shape index: {0}]
  %s8 = inlined_call_operand.vmem [shape: f32[1,1,32], index: 8, kind: output, shape index: {1}]
  %s9 = inlined_call_operand.vmem [shape: f32[1,1,32], index: 9, kind: output, shape index: {2}]
  %10 = xla_tuple %s7, %s8, %s9
  %s11 = sld [smem:[#allocation0]]
  $region62: #{_mlp_forward.4} parent=0
    _
  %s13 = ssub.s32 1, %s11
  %s14 = scalar_select 0, %s13, %s11
  // Predicated region
  $region2: #{_mlp_forward.4} parent=0 // pred_check
    _
  $region3: #{_mlp_forward.4} parent=0 // pred_check_branch
    %16 = sbr.rel (0) target = $region5
  $region4: #{_mlp_forward.4} parent=0 // pred_region
    _
  $region5: #{_mlp_forward.4} parent=0 // pred_fallthru
    _
  // Predicated region
  $region6: #{_mlp_forward.4} parent=0 // pred_check
    _
  $region7: #{_mlp_forward.4} parent=0 // pred_check_branch
    %18 = sbr.rel (0) target = $region9
  $region8: #{_mlp_forward.4} parent=0 // pred_region
    _
  $region9: #{_mlp_forward.4} parent=0 // pred_fallthru
    _
  // Predicated region
  $region10: #{_mlp_forward.4} parent=0 // pred_check
    _
  $region11: #{_mlp_forward.4} parent=0 // pred_check_branch
    %20 = sbr.rel (0) target = $region13
  $region12: #{_mlp_forward.4} parent=0 // pred_region
    _
  $region13: #{_mlp_forward.4} parent=0 // pred_fallthru
    _
  // Predicated region
  $region14: #{_mlp_forward.4} parent=0 // pred_check
    _
  $region15: #{_mlp_forward.4} parent=0 // pred_check_branch
    %22 = sbr.rel (0) target = $region17
  $region16: #{_mlp_forward.4} parent=0 // pred_region
    _
  $region17: #{_mlp_forward.4} parent=0 // pred_fallthru
    _
  // Predicated region
  $region18: #{_mlp_forward.4} parent=0 // pred_check
    _
  $region19: #{_mlp_forward.4} parent=0 // pred_check_branch
    %24 = sbr.rel (0) target = $region21
  $region20: #{_mlp_forward.4} parent=0 // pred_region
    _
  $region21: #{_mlp_forward.4} parent=0 // pred_fallthru
    _
  // Predicated region
  $region22: #{_mlp_forward.4} parent=0 // pred_check
    _
  $region23: #{_mlp_forward.4} parent=0 // pred_check_branch
    %26 = sbr.rel (0) target = $region25
  $region24: #{_mlp_forward.4} parent=0 // pred_region
    _
  $region25: #{_mlp_forward.4} parent=0 // pred_fallthru
    _
  // Predicated region
  $region26: #{_mlp_forward.4} parent=0 // pred_check
    _
  $region27: #{_mlp_forward.4} parent=0 // pred_check_branch
    %28 = sbr.rel (0) target = $region29
  $region28: #{_mlp_forward.4} parent=0 // pred_region
    _
  $region29: #{_mlp_forward.4} parent=0 // pred_fallthru
    _
  %v30 = vld [vmem:[%s0] sm:$0x1]
  %v31 = vadd.f32 %v30, 0.0
  %v32 = vld [vmem:[%s1] sm:$0x1]
  %v33 = vadd.f32 %v32, 0.0
  %v34 = vmul.f32 %v31, 0.125
  %v35 = vmul.f32 %v33, 0.125
  %v36 = vmul.f32 %v34, %v34
  %v37 = vsub.f32 %v35, %v36
  %v38 = vmax.f32 %v37, 0.0
  %v39 = vld [vmem:[%s2] sm:$0x1]
  %v40 = vadd.f32 %v38, 1e-05
  %v41 = vrsqrt.pop %v40
  %v42 = vmul.f32 %v39, %v41
  %v43 = vld [vmem:[%s3] sm:$0x1]
  %v44 = vmul.f32 %v34, %v42
  %v45 = vsub.f32 %v43, %v44
  %v46 = vld [vmem:[%s4] sm:$0xf]
  %v47 = vld [vmem:[%s4 + $0x4] sm:$0xf]
  %v48 = vunpack.c.l.bf16 %v46
  %v49 = vunpack.c.l.bf16 %v47
  %v51 = vlaneseq
  %v52 = vshrl.u32 %v51, 7
  %v53 = vsub.s32 0, %v52
  %v54 = vrot.slane %v42, %v53
  %v56 = vmul.f32 %v48, %v54
  %v57 = vmul.f32 %v49, %v54
  %v59 = vlaneseq
  %v60 = vshrl.u32 %v59, 7
  %v61 = vsub.s32 0, %v60
  %v62 = vrot.slane %v45, %v61
  %v64 = vadd.f32 %v56, %v62
  %v65 = vadd.f32 %v57, %v62
  %v66 = vpack.c.bf16 %v65, %v64
  %v67 = vld [vmem:[%s5] sm:$0xf]
  %v68 = vld [vmem:[%s5 + $0x4] sm:$0xf]
  %v69 = vld [vmem:[%s5 + $0x8] sm:$0xf]
  %v70 = vld [vmem:[%s5 + $0xc] sm:$0xf]
  %v71 = vld [vmem:[%s5 + $0x10] sm:$0xf]
  %v72 = vld [vmem:[%s5 + $0x14] sm:$0xf]
  %v73 = vld [vmem:[%s5 + $0x18] sm:$0xf]
  %v74 = vld [vmem:[%s5 + $0x1c] sm:$0xf]
  %v75 = vld [vmem:[%s6] sm:$0x1]
  %v77 = vlaneseq
  %v78 = vshrl.u32 %v77, 7
  %v79 = vsub.s32 0, %v78
  %v80 = vrot.slane %v75, %v79
  %v90 = vunpack.c.l.b16 %v67
  %v91 = vunpack.c.l.b16 %v68
  %v92 = vunpack.c.l.b16 %v69
  %v93 = vunpack.c.l.b16 %v70
  %v94 = vunpack.c.l.b16 %v71
  %v95 = vunpack.c.l.b16 %v72
  %v96 = vunpack.c.l.b16 %v73
  %v97 = vunpack.c.l.b16 %v74
  %v98 = vpack.c.b16 %v91, %v90
  %v99 = vpack.c.b16 %v93, %v92
  %v100 = vpack.c.b16 %v95, %v94
  %v101 = vpack.c.b16 %v97, %v96
  %vm106 = vcmask 523264
  %v108 = vsel %vm106, %v66, 0
  %110 = vmatprep.subr.bf16.mxu0 0
  %111 = vmatpush1.bf16.msra.mxu0 %v98
  %112 = vmatprep.subr.bf16.mxu0 0
  %113 = vmatpush1.bf16.msra.mxu0 %v99
  %114 = vmatprep.subr.bf16.mxu0 0
  %115 = vmatpush1.bf16.msra.mxu0 %v100
  %116 = vmatprep.subr.bf16.mxu0 0
  %117 = vmatpush1.bf16.msra.mxu0 %v101
  %118 = vmatprep.subr.bf16.mxu0 0
  %119 = vmatpush1.bf16.msra.mxu0 0
  %120 = vmatprep.subr.bf16.mxu0 0
  %121 = vmatpush1.bf16.msra.mxu0 0
  %122 = vmatprep.subr.bf16.mxu0 0
  %123 = vmatpush1.bf16.msra.mxu0 0
  %124 = vmatprep.subr.bf16.mxu0 0
  %125 = vmatpush1.bf16.msra.mxu0 0
  %126 = vmatprep.subr.bf16.mxu0 0
  %127 = vmatpush1.bf16.msra.mxu0 0
  %128 = vmatprep.subr.bf16.mxu0 0
  %129 = vmatpush1.bf16.msra.mxu0 0
  %130 = vmatprep.subr.bf16.mxu0 0
  %131 = vmatpush1.bf16.msra.mxu0 0
  %132 = vmatprep.subr.bf16.mxu0 0
  %133 = vmatpush1.bf16.msra.mxu0 0
  %134 = vmatprep.subr.bf16.mxu0 0
  %135 = vmatpush1.bf16.msra.mxu0 0
  %136 = vmatprep.subr.bf16.mxu0 0
  %137 = vmatpush1.bf16.msra.mxu0 0
  %138 = vmatprep.subr.bf16.mxu0 0
  %139 = vmatpush1.bf16.msra.mxu0 0
  %140 = vmatprep.subr.bf16.mxu0 0
  %141 = vmatpush1.bf16.msra.mxu0 0
  %142 = vmatprep.mubr.bf16.mxu0 0
  %143 = vmatmul.mubr.bf16.gmra.mrb[0].mxu0 %v108
  %v144 = vpop.f32.mrb[0].mxu0
  %v145 = vadd.f32 %v80, %v144
  %v146 = vpop.f32.mrb[0].mxu0
  %v147 = vpop.f32.mrb[0].mxu0
  %v148 = vadd.f32 %v80, %v147
  %v149 = vpop.f32.mrb[0].mxu0
  %150 = vdwg.mxu0
  %v151 = vmax.f32 %v145, 0.0
  %v152 = vmax.f32 %v148, 0.0
  %s153 = sadd.s32 0, 1
  %s154 = smul.u32 %s153, 16
  %p155 = scmp.gt.s32.totalorder %s154, 8
  %p156 = scmp.le.s32.totalorder %s154, 8
  // Predicated region
  $region30: #{_mlp_forward.4} parent=0 // pred_check
    %p157 = pneg %p156
  $region31: #{_mlp_forward.4} parent=0 // pred_check_branch
    %159 = sbr.rel (%p157) target = $region33
  $region32: #{_mlp_forward.4} parent=0 // pred_region
    %vm160 = vcmask 261120
    %v161 = vsel %vm160, %v151, 0.0
    %v162 = vsel %vm160, %v152, 0.0
    %v163 = vadd.f32 %v161, %v162
    %v164 = vrot.slane %v163, 4
    %v165 = vadd.f32 %v163, %v164
    %v166 = vrot.slane %v165, 2
    %v167 = vadd.f32 %v165, %v166
    %v168 = vrot.slane %v167, 1
    %v169 = vadd.f32 %v167, %v168
    %vm170 = vcmask 253952
    %171 = vst.msk [vmem:[%s8] sm:$0x1] %vm170, %v169
    %v172 = vmul.f32 %v151, %v151
    %v173 = vmul.f32 %v152, %v152
    %v174 = vsel %vm160, %v172, 0.0
    %v175 = vsel %vm160, %v173, 0.0
    %v176 = vadd.f32 %v174, %v175
    %v177 = vrot.slane %v176, 4
    %v178 = vadd.f32 %v176, %v177
    %v179 = vrot.slane %v178, 2
    %v180 = vadd.f32 %v178, %v179
    %v181 = vrot.slane %v180, 1
    %v182 = vadd.f32 %v180, %v181
    %183 = vst.msk [vmem:[%s9] sm:$0x1] %vm170, %v182
  $region33: #{_mlp_forward.4} parent=0 // pred_fallthru
    _
  // Predicated region
  $region34: #{_mlp_forward.4} parent=0 // pred_check
    %p184 = pneg %p155
  $region35: #{_mlp_forward.4} parent=0 // pred_check_branch
    %186 = sbr.rel (%p184) target = $region37
  $region36: #{_mlp_forward.4} parent=0 // pred_region
    %s187 = smul.u32 0, 16
    %v188 = vlaneseq
    %v189 = vshrl.u32 %v188, 7
    %v190 = vadd.s32 %v189, 8
    %v191 = vstv %s187
    %v192 = vadd.s32 %v191, %v189
    %v193 = vadd.s32 %v191, %v190
    %vm194 = vcmp.lt.s32.totalorder %v192, 8
    %vm195 = vcmp.lt.s32.totalorder %v193, 8
    %v196 = vsel %vm194, %v151, 0.0
    %v197 = vsel %vm195, %v152, 0.0
    %vm198 = vcmask 261120
    %v199 = vsel %vm198, %v196, 0.0
    %v200 = vsel %vm198, %v197, 0.0
    %v201 = vadd.f32 %v199, %v200
    %v202 = vrot.slane %v201, 4
    %v203 = vadd.f32 %v201, %v202
    %v204 = vrot.slane %v203, 2
    %v205 = vadd.f32 %v203, %v204
    %v206 = vrot.slane %v205, 1
    %v207 = vadd.f32 %v205, %v206
    %vm208 = vcmask 253952
    %209 = vst.msk [vmem:[%s8] sm:$0x1] %vm208, %v207
    %v210 = vmul.f32 %v196, %v196
    %v211 = vmul.f32 %v197, %v197
    %v212 = vsel %vm198, %v210, 0.0
    %v213 = vsel %vm198, %v211, 0.0
    %v214 = vadd.f32 %v212, %v213
    %v215 = vrot.slane %v214, 4
    %v216 = vadd.f32 %v214, %v215
    %v217 = vrot.slane %v216, 2
    %v218 = vadd.f32 %v216, %v217
    %v219 = vrot.slane %v218, 1
    %v220 = vadd.f32 %v218, %v219
    %221 = vst.msk [vmem:[%s9] sm:$0x1] %vm208, %v220
  $region37: #{_mlp_forward.4} parent=0 // pred_fallthru
    _
  %v222 = vpack.c.bf16 %v152, %v151
  %v224 = vunpack.c.l.b16 %v222
  %v225 = vunpack.c.h.b16 %v222
  %v226 = vpack.c.b16 %v224, %v224
  %v227 = vpack.c.b16 %v225, %v225
  %vm230 = vcmask 257024
  %231 = vst.msk [vmem:[%s7] sm:$0xf] %vm230, %v226
  %232 = vst.msk [vmem:[%s7 + $0x4] sm:$0xf] %vm230, %v227
  // Predicated region
  $region38: #{_mlp_forward.4} parent=0 // pred_check
    _
  $region39: #{_mlp_forward.4} parent=0 // pred_check_branch
    %234 = sbr.rel (0) target = $region41
  $region40: #{_mlp_forward.4} parent=0 // pred_region
    _
  $region41: #{_mlp_forward.4} parent=0 // pred_fallthru
    _
  // Predicated region
  $region42: #{_mlp_forward.4} parent=0 // pred_check
    _
  $region43: #{_mlp_forward.4} parent=0 // pred_check_branch
    %236 = sbr.rel (0) target = $region45
  $region44: #{_mlp_forward.4} parent=0 // pred_region
    _
  $region45: #{_mlp_forward.4} parent=0 // pred_fallthru
    _
  // Predicated region
  $region46: #{_mlp_forward.4} parent=0 // pred_check
    _
  $region47: #{_mlp_forward.4} parent=0 // pred_check_branch
    %238 = sbr.rel (0) target = $region49
  $region48: #{_mlp_forward.4} parent=0 // pred_region
    _
  $region49: #{_mlp_forward.4} parent=0 // pred_fallthru
    _
  // Predicated region
  $region50: #{_mlp_forward.4} parent=0 // pred_check
    _
  $region51: #{_mlp_forward.4} parent=0 // pred_check_branch
    %240 = sbr.rel (0) target = $region53
  $region52: #{_mlp_forward.4} parent=0 // pred_region
    _
  $region53: #{_mlp_forward.4} parent=0 // pred_fallthru
    _
  // Predicated region
  $region54: #{_mlp_forward.4} parent=0 // pred_check
    _
  $region55: #{_mlp_forward.4} parent=0 // pred_check_branch
    %242 = sbr.rel (0) target = $region57
  $region56: #{_mlp_forward.4} parent=0 // pred_region
    _
  $region57: #{_mlp_forward.4} parent=0 // pred_fallthru
    _
  // Predicated region
  $region58: #{_mlp_forward.4} parent=0 // pred_check
    _
  $region59: #{_mlp_forward.4} parent=0 // pred_check_branch
    %244 = sbr.rel (0) target = $region61
  $region60: #{_mlp_forward.4} parent=0 // pred_region
    _
  $region61: #{_mlp_forward.4} parent=0 // pred_fallthru
    _

// kernel: _mlp_forward.5
$region0: #{_mlp_forward.5}
  #allocation0 [shape = 'u32[]', space=smem, size = 0x4, offset = 0x4, fixed_abs, tag = 'smem constant byte address 0x4 - core index']
  #allocation1 [shape = 'u32[144,128]{1,0:T(1,128)}', space=vmem, size = 0x12000, scoped, tag = 'internal scratch']
  %s0 = inlined_call_operand.vmem [shape: f32[1,1,32], index: 0, kind: input, shape index: {}]
  %s1 = inlined_call_operand.vmem [shape: f32[1,1,32], index: 1, kind: input, shape index: {}]
  %s2 = inlined_call_operand.vmem [shape: f32[1,32], index: 2, kind: input, shape index: {}]
  %s3 = inlined_call_operand.vmem [shape: f32[1,32], index: 3, kind: input, shape index: {}]
  %s4 = inlined_call_operand.vmem [shape: bf16[16,32], index: 4, kind: input, shape index: {}]
  %s5 = inlined_call_operand.vmem [shape: bf16[32,10], index: 5, kind: input, shape index: {}]
  %s6 = inlined_call_operand.vmem [shape: f32[1,10], index: 6, kind: input, shape index: {}]
  %s7 = inlined_call_operand.vmem [shape: f32[16,10], index: 7, kind: output, shape index: {}]
  %s8 = sld [smem:[#allocation0]]
  $region38: #{_mlp_forward.5} parent=0
    _
  %s10 = ssub.s32 1, %s8
  %s11 = scalar_select 0, %s10, %s8
  // Predicated region
  $region2: #{_mlp_forward.5} parent=0 // pred_check
    _
  $region3: #{_mlp_forward.5} parent=0 // pred_check_branch
    %13 = sbr.rel (0) target = $region5
  $region4: #{_mlp_forward.5} parent=0 // pred_region
    _
  $region5: #{_mlp_forward.5} parent=0 // pred_fallthru
    _
  // Predicated region
  $region6: #{_mlp_forward.5} parent=0 // pred_check
    _
  $region7: #{_mlp_forward.5} parent=0 // pred_check_branch
    %15 = sbr.rel (0) target = $region9
  $region8: #{_mlp_forward.5} parent=0 // pred_region
    _
  $region9: #{_mlp_forward.5} parent=0 // pred_fallthru
    _
  // Predicated region
  $region10: #{_mlp_forward.5} parent=0 // pred_check
    _
  $region11: #{_mlp_forward.5} parent=0 // pred_check_branch
    %17 = sbr.rel (0) target = $region13
  $region12: #{_mlp_forward.5} parent=0 // pred_region
    _
  $region13: #{_mlp_forward.5} parent=0 // pred_fallthru
    _
  // Predicated region
  $region14: #{_mlp_forward.5} parent=0 // pred_check
    _
  $region15: #{_mlp_forward.5} parent=0 // pred_check_branch
    %19 = sbr.rel (0) target = $region17
  $region16: #{_mlp_forward.5} parent=0 // pred_region
    _
  $region17: #{_mlp_forward.5} parent=0 // pred_fallthru
    _
  // Predicated region
  $region18: #{_mlp_forward.5} parent=0 // pred_check
    _
  $region19: #{_mlp_forward.5} parent=0 // pred_check_branch
    %21 = sbr.rel (0) target = $region21
  $region20: #{_mlp_forward.5} parent=0 // pred_region
    _
  $region21: #{_mlp_forward.5} parent=0 // pred_fallthru
    _
  // Predicated region
  $region22: #{_mlp_forward.5} parent=0 // pred_check
    _
  $region23: #{_mlp_forward.5} parent=0 // pred_check_branch
    %23 = sbr.rel (0) target = $region25
  $region24: #{_mlp_forward.5} parent=0 // pred_region
    _
  $region25: #{_mlp_forward.5} parent=0 // pred_fallthru
    _
  // Predicated region
  $region26: #{_mlp_forward.5} parent=0 // pred_check
    _
  $region27: #{_mlp_forward.5} parent=0 // pred_check_branch
    %25 = sbr.rel (0) target = $region29
  $region28: #{_mlp_forward.5} parent=0 // pred_region
    _
  $region29: #{_mlp_forward.5} parent=0 // pred_fallthru
    _
  %v27 = vld [vmem:[%s0] sm:$0x1]
  %v28 = vadd.f32 %v27, 0.0
  %v29 = vld [vmem:[%s1] sm:$0x1]
  %v30 = vadd.f32 %v29, 0.0
  %v31 = vmul.f32 %v28, 0.125
  %v32 = vmul.f32 %v30, 0.125
  %v33 = vmul.f32 %v31, %v31
  %v34 = vsub.f32 %v32, %v33
  %v35 = vmax.f32 %v34, 0.0
  %v36 = vld [vmem:[%s2] sm:$0x1]
  %v37 = vadd.f32 %v35, 1e-05
  %v38 = vrsqrt.pop %v37
  %v39 = vmul.f32 %v36, %v38
  %v40 = vld [vmem:[%s3] sm:$0x1]
  %v41 = vmul.f32 %v31, %v39
  %v42 = vsub.f32 %v40, %v41
  %v43 = vld [vmem:[%s4] sm:$0xf]
  %v44 = vld [vmem:[%s4 + $0x4] sm:$0xf]
  %v45 = vunpack.c.l.bf16 %v43
  %v46 = vunpack.c.l.bf16 %v44
  %v48 = vlaneseq
  %v49 = vshrl.u32 %v48, 7
  %v50 = vsub.s32 0, %v49
  %v51 = vrot.slane %v39, %v50
  %v53 = vmul.f32 %v45, %v51
  %v54 = vmul.f32 %v46, %v51
  %v56 = vlaneseq
  %v57 = vshrl.u32 %v56, 7
  %v58 = vsub.s32 0, %v57
  %v59 = vrot.slane %v42, %v58
  %v61 = vadd.f32 %v53, %v59
  %v62 = vadd.f32 %v54, %v59
  %v63 = vpack.c.bf16 %v62, %v61
  %v64 = vld [vmem:[%s5] sm:$0xf]
  %v65 = vld [vmem:[%s5 + $0x4] sm:$0xf]
  %v66 = vld [vmem:[%s5 + $0x8] sm:$0xf]
  %v67 = vld [vmem:[%s5 + $0xc] sm:$0xf]
  %v68 = vld [vmem:[%s6] sm:$0x1]
  %v70 = vlaneseq
  %v71 = vshrl.u32 %v70, 7
  %v72 = vsub.s32 0, %v71
  %v73 = vrot.slane %v68, %v72
  %v79 = vunpack.c.l.b16 %v64
  %v80 = vunpack.c.l.b16 %v65
  %v81 = vunpack.c.l.b16 %v66
  %v82 = vunpack.c.l.b16 %v67
  %v83 = vpack.c.b16 %v80, %v79
  %v84 = vpack.c.b16 %v82, %v81
  %vm87 = vcmask 261120
  %v89 = vsel %vm87, %v63, 0
  %91 = vmatprep.subr.bf16.mxu0 0
  %92 = vmatpush1.bf16.msra.mxu0 %v83
  %93 = vmatprep.subr.bf16.mxu0 0
  %94 = vmatpush1.bf16.msra.mxu0 %v84
  %95 = vmatprep.subr.bf16.mxu0 0
  %96 = vmatpush1.bf16.msra.mxu0 0
  %97 = vmatprep.subr.bf16.mxu0 0
  %98 = vmatpush1.bf16.msra.mxu0 0
  %99 = vmatprep.subr.bf16.mxu0 0
  %100 = vmatpush1.bf16.msra.mxu0 0
  %101 = vmatprep.subr.bf16.mxu0 0
  %102 = vmatpush1.bf16.msra.mxu0 0
  %103 = vmatprep.subr.bf16.mxu0 0
  %104 = vmatpush1.bf16.msra.mxu0 0
  %105 = vmatprep.subr.bf16.mxu0 0
  %106 = vmatpush1.bf16.msra.mxu0 0
  %107 = vmatprep.subr.bf16.mxu0 0
  %108 = vmatpush1.bf16.msra.mxu0 0
  %109 = vmatprep.subr.bf16.mxu0 0
  %110 = vmatpush1.bf16.msra.mxu0 0
  %111 = vmatprep.subr.bf16.mxu0 0
  %112 = vmatpush1.bf16.msra.mxu0 0
  %113 = vmatprep.subr.bf16.mxu0 0
  %114 = vmatpush1.bf16.msra.mxu0 0
  %115 = vmatprep.subr.bf16.mxu0 0
  %116 = vmatpush1.bf16.msra.mxu0 0
  %117 = vmatprep.subr.bf16.mxu0 0
  %118 = vmatpush1.bf16.msra.mxu0 0
  %119 = vmatprep.subr.bf16.mxu0 0
  %120 = vmatpush1.bf16.msra.mxu0 0
  %121 = vmatprep.subr.bf16.mxu0 0
  %122 = vmatpush1.bf16.msra.mxu0 0
  %123 = vmatprep.mubr.bf16.mxu0 0
  %124 = vmatmul.mubr.bf16.gmra.mrb[0].mxu0 %v89
  %v125 = vpop.f32.mrb[0].mxu0
  %v126 = vadd.f32 %v73, %v125
  %v127 = vpop.f32.mrb[0].mxu0
  %v128 = vpop.f32.mrb[0].mxu0
  %v129 = vadd.f32 %v73, %v128
  %v130 = vpop.f32.mrb[0].mxu0
  %131 = vdwg.mxu0
  %vm132 = vcmask 80896
  %v133 = vsel %vm132, %v126, -inf
  %134 = vmax.xlane.f32.xlu0 %v133
  %v135 = vpop.xlane.xlu0 %134
  %v136 = vsel %vm132, %v129, -inf
  %137 = vmax.xlane.f32.xlu0 %v136
  %v138 = vpop.xlane.xlu0 %137
  %v139 = vsub.f32 %v126, %v135
  %v140 = vsub.f32 %v129, %v138
  %v141 = vmul.f32 %v139, 1.442695
  %v142 = vpow.pop %v141
  %v143 = vmul.f32 %v140, 1.442695
  %v144 = vpow.pop %v143
  %v145 = vsel %vm132, %v142, 0.0
  %146 = vadd.xlane.f32.xlu0 %v145
  %v147 = vpop.xlane.xlu0 %146
  %v148 = vsel %vm132, %v144, 0.0
  %149 = vadd.xlane.f32.xlu0 %v148
  %v150 = vpop.xlane.xlu0 %149
  %v151 = vlog2.pop %v147
  %v152 = vmul.f32 %v151, 0.6931472
  %v153 = vlog2.pop %v150
  %v154 = vmul.f32 %v153, 0.6931472
  %v155 = vsub.f32 %v139, %v152
  %v156 = vsub.f32 %v140, %v154
  %157 = vst.msk [vmem:[%s7] sm:$0xff] %vm132, %v155
  %158 = vst.msk [vmem:[%s7 + $0x8] sm:$0xff] %vm132, %v156
  // Predicated region
  $region30: #{_mlp_forward.5} parent=0 // pred_check
    _
  $region31: #{_mlp_forward.5} parent=0 // pred_check_branch
    %160 = sbr.rel (0) target = $region33
  $region32: #{_mlp_forward.5} parent=0 // pred_region
    _
  $region33: #{_mlp_forward.5} parent=0 // pred_fallthru
    _
  // Predicated region
  $region34: #{_mlp_forward.5} parent=0 // pred_check
    _
  $region35: #{_mlp_forward.5} parent=0 // pred_check_branch
    %162 = sbr.rel (0) target = $region37
  $region36: #{_mlp_forward.5} parent=0 // pred_region
    _
  $region37: #{_mlp_forward.5} parent=0 // pred_fallthru
    _

// kernel: _mlp_forward.3
$region0: #{_mlp_forward.3}
  #allocation0 [shape = 'u32[]', space=smem, size = 0x4, offset = 0x4, fixed_abs, tag = 'smem constant byte address 0x4 - core index']
  #allocation1 [shape = 'u32[144,128]{1,0:T(1,128)}', space=vmem, size = 0x12000, scoped, tag = 'internal scratch']
  %s0 = inlined_call_operand.vmem [shape: f32[16,784], index: 0, kind: input, shape index: {}]
  %s1 = inlined_call_operand.vmem [shape: bf16[784,64], index: 1, kind: input, shape index: {}]
  %s2 = inlined_call_operand.vmem [shape: f32[1,64], index: 2, kind: input, shape index: {}]
  %s3 = inlined_call_operand.vmem [shape: bf16[16,64], index: 3, kind: output, shape index: {0}]
  %s4 = inlined_call_operand.vmem [shape: f32[1,1,64], index: 4, kind: output, shape index: {1}]
  %s5 = inlined_call_operand.vmem [shape: f32[1,1,64], index: 5, kind: output, shape index: {2}]
  %6 = xla_tuple %s3, %s4, %s5
  %s7 = sld [smem:[#allocation0]]
  $region46: #{_mlp_forward.3} parent=0
    _
  %s9 = ssub.s32 1, %s7
  %s10 = scalar_select 0, %s9, %s7
  // Predicated region
  $region2: #{_mlp_forward.3} parent=0 // pred_check
    _
  $region3: #{_mlp_forward.3} parent=0 // pred_check_branch
    %12 = sbr.rel (0) target = $region5
  $region4: #{_mlp_forward.3} parent=0 // pred_region
    _
  $region5: #{_mlp_forward.3} parent=0 // pred_fallthru
    _
  // Predicated region
  $region6: #{_mlp_forward.3} parent=0 // pred_check
    _
  $region7: #{_mlp_forward.3} parent=0 // pred_check_branch
    %14 = sbr.rel (0) target = $region9
  $region8: #{_mlp_forward.3} parent=0 // pred_region
    _
  $region9: #{_mlp_forward.3} parent=0 // pred_fallthru
    _
  // Predicated region
  $region10: #{_mlp_forward.3} parent=0 // pred_check
    _
  $region11: #{_mlp_forward.3} parent=0 // pred_check_branch
    %16 = sbr.rel (0) target = $region13
  $region12: #{_mlp_forward.3} parent=0 // pred_region
    _
  $region13: #{_mlp_forward.3} parent=0 // pred_fallthru
    _
  %v18 = vld [vmem:[%s0] sm:$0xff]
  %v19 = vld [vmem:[%s0 + $0x8] sm:$0xff]
  %v20 = vld [vmem:[%s0 + $0x10] sm:$0xff]
  %v21 = vld [vmem:[%s0 + $0x18] sm:$0xff]
  %v22 = vld [vmem:[%s0 + $0x20] sm:$0xff]
  %v23 = vld [vmem:[%s0 + $0x28] sm:$0xff]
  %v24 = vld [vmem:[%s0 + $0x30] sm:$0xff]
  %v25 = vld [vmem:[%s0 + $0x38] sm:$0xff]
  %v26 = vld [vmem:[%s0 + $0x40] sm:$0xff]
  %v27 = vld [vmem:[%s0 + $0x48] sm:$0xff]
  %v28 = vld [vmem:[%s0 + $0x50] sm:$0xff]
  %v29 = vld [vmem:[%s0 + $0x58] sm:$0xff]
  %v30 = vld [vmem:[%s0 + $0x60] sm:$0xff]
  %v31 = vld [vmem:[%s0 + $0x68] sm:$0xff]
  %v32 = vpack.c.bf16 %v25, %v18
  %v33 = vpack.c.bf16 %v26, %v19
  %v34 = vpack.c.bf16 %v27, %v20
  %v35 = vpack.c.bf16 %v28, %v21
  %v36 = vpack.c.bf16 %v29, %v22
  %v37 = vpack.c.bf16 %v30, %v23
  %v38 = vpack.c.bf16 %v31, %v24
  %v39 = vld [vmem:[%s1] sm:$0xf]
  %v40 = vld [vmem:[%s1 + $0x4] sm:$0xf]
  %v41 = vld [vmem:[%s1 + $0x8] sm:$0xf]
  %v42 = vld [vmem:[%s1 + $0xc] sm:$0xf]
  %v43 = vld [vmem:[%s1 + $0x10] sm:$0xf]
  %v44 = vld [vmem:[%s1 + $0x14] sm:$0xf]
  %v45 = vld [vmem:[%s1 + $0x18] sm:$0xf]
  %v46 = vld [vmem:[%s1 + $0x1c] sm:$0xf]
  %v47 = vld [vmem:[%s1 + $0x20] sm:$0xf]
  %v48 = vld [vmem:[%s1 + $0x24] sm:$0xf]
  %v49 = vld [vmem:[%s1 + $0x28] sm:$0xf]
  %v50 = vld [vmem:[%s1 + $0x2c] sm:$0xf]
  %v51 = vld [vmem:[%s1 + $0x30] sm:$0xf]
  %v52 = vld [vmem:[%s1 + $0x34] sm:$0xf]
  %v53 = vld [vmem:[%s1 + $0x38] sm:$0xf]
  %v54 = vld [vmem:[%s1 + $0x3c] sm:$0xf]
  %v55 = vld [vmem:[%s1 + $0x40] sm:$0xf]
  %v56 = vld [vmem:[%s1 + $0x44] sm:$0xf]
  %v57 = vld [vmem:[%s1 + $0x48] sm:$0xf]
  %v58 = vld [vmem:[%s1 + $0x4c] sm:$0xf]
  %v59 = vld [vmem:[%s1 + $0x50] sm:$0xf]
  %v60 = vld [vmem:[%s1 + $0x54] sm:$0xf]
  %v61 = vld [vmem:[%s1 + $0x58] sm:$0xf]
  %v62 = vld [vmem:[%s1 + $0x5c] sm:$0xf]
  %v63 = vld [vmem:[%s1 + $0x60] sm:$0xf]
  %v64 = vld [vmem:[%s1 + $0x64] sm:$0xf]
  %v65 = vld [vmem:[%s1 + $0x68] sm:$0xf]
  %v66 = vld [vmem:[%s1 + $0x6c] sm:$0xf]
  %v67 = vld [vmem:[%s1 + $0x70] sm:$0xf]
  %v68 = vld [vmem:[%s1 + $0x74] sm:$0xf]
  %v69 = vld [vmem:[%s1 + $0x78] sm:$0xf]
  %v70 = vld [vmem:[%s1 + $0x7c] sm:$0xf]
  %v71 = vld [vmem:[%s1 + $0x80] sm:$0xf]
  %v72 = vld [vmem:[%s1 + $0x84] sm:$0xf]
  %v73 = vld [vmem:[%s1 + $0x88] sm:$0xf]
  %v74 = vld [vmem:[%s1 + $0x8c] sm:$0xf]
  %v75 = vld [vmem:[%s1 + $0x90] sm:$0xf]
  %v76 = vld [vmem:[%s1 + $0x94] sm:$0xf]
  %v77 = vld [vmem:[%s1 + $0x98] sm:$0xf]
  %v78 = vld [vmem:[%s1 + $0x9c] sm:$0xf]
  %v79 = vld [vmem:[%s1 + $0xa0] sm:$0xf]
  %v80 = vld [vmem:[%s1 + $0xa4] sm:$0xf]
  %v81 = vld [vmem:[%s1 + $0xa8] sm:$0xf]
  %v82 = vld [vmem:[%s1 + $0xac] sm:$0xf]
  %v83 = vld [vmem:[%s1 + $0xb0] sm:$0xf]
  %v84 = vld [vmem:[%s1 + $0xb4] sm:$0xf]
  %v85 = vld [vmem:[%s1 + $0xb8] sm:$0xf]
  %v86 = vld [vmem:[%s1 + $0xbc] sm:$0xf]
  %v87 = vld [vmem:[%s1 + $0xc0] sm:$0xf]
  %v88 = vld [vmem:[%s1 + $0xc4] sm:$0xf]
  %v89 = vld [vmem:[%s1 + $0xc8] sm:$0xf]
  %v90 = vld [vmem:[%s1 + $0xcc] sm:$0xf]
  %v91 = vld [vmem:[%s1 + $0xd0] sm:$0xf]
  %v92 = vld [vmem:[%s1 + $0xd4] sm:$0xf]
  %v93 = vld [vmem:[%s1 + $0xd8] sm:$0xf]
  %v94 = vld [vmem:[%s1 + $0xdc] sm:$0xf]
  %v95 = vld [vmem:[%s1 + $0xe0] sm:$0xf]
  %v96 = vld [vmem:[%s1 + $0xe4] sm:$0xf]
  %v97 = vld [vmem:[%s1 + $0xe8] sm:$0xf]
  %v98 = vld [vmem:[%s1 + $0xec] sm:$0xf]
  %v99 = vld [vmem:[%s1 + $0xf0] sm:$0xf]
  %v100 = vld [vmem:[%s1 + $0xf4] sm:$0xf]
  %v101 = vld [vmem:[%s1 + $0xf8] sm:$0xf]
  %v102 = vld [vmem:[%s1 + $0xfc] sm:$0xf]
  %v103 = vld [vmem:[%s1 + $0x100] sm:$0xf]
  %v104 = vld [vmem:[%s1 + $0x104] sm:$0xf]
  %v105 = vld [vmem:[%s1 + $0x108] sm:$0xf]
  %v106 = vld [vmem:[%s1 + $0x10c] sm:$0xf]
  %v107 = vld [vmem:[%s1 + $0x110] sm:$0xf]
  %v108 = vld [vmem:[%s1 + $0x114] sm:$0xf]
  %v109 = vld [vmem:[%s1 + $0x118] sm:$0xf]
  %v110 = vld [vmem:[%s1 + $0x11c] sm:$0xf]
  %v111 = vld [vmem:[%s1 + $0x120] sm:$0xf]
  %v112 = vld [vmem:[%s1 + $0x124] sm:$0xf]
  %v113 = vld [vmem:[%s1 + $0x128] sm:$0xf]
  %v114 = vld [vmem:[%s1 + $0x12c] sm:$0xf]
  %v115 = vld [vmem:[%s1 + $0x130] sm:$0xf]
  %v116 = vld [vmem:[%s1 + $0x134] sm:$0xf]
  %v117 = vld [vmem:[%s1 + $0x138] sm:$0xf]
  %v118 = vld [vmem:[%s1 + $0x13c] sm:$0xf]
  %v119 = vld [vmem:[%s1 + $0x140] sm:$0xf]
  %v120 = vld [vmem:[%s1 + $0x144] sm:$0xf]
  %v121 = vld [vmem:[%s1 + $0x148] sm:$0xf]
  %v122 = vld [vmem:[%s1 + $0x14c] sm:$0xf]
  %v123 = vld [vmem:[%s1 + $0x150] sm:$0xf]
  %v124 = vld [vmem:[%s1 + $0x154] sm:$0xf]
  %v125 = vld [vmem:[%s1 + $0x158] sm:$0xf]
  %v126 = vld [vmem:[%s1 + $0x15c] sm:$0xf]
  %v127 = vld [vmem:[%s1 + $0x160] sm:$0xf]
  %v128 = vld [vmem:[%s1 + $0x164] sm:$0xf]
  %v129 = vld [vmem:[%s1 + $0x168] sm:$0xf]
  %v130 = vld [vmem:[%s1 + $0x16c] sm:$0xf]
  %v131 = vld [vmem:[%s1 + $0x170] sm:$0xf]
  %v132 = vld [vmem:[%s1 + $0x174] sm:$0xf]
  %v133 = vld [vmem:[%s1 + $0x178] sm:$0xf]
  %v134 = vld [vmem:[%s1 + $0x17c] sm:$0xf]
  %v135 = vld [vmem:[%s1 + $0x180] sm:$0xf]
  %v136 = vld [vmem:[%s1 + $0x184] sm:$0xf]
  %v137 = vld [vmem:[%s2] sm:$0x1]
  %v139 = vlaneseq
  %v140 = vshrl.u32 %v139, 7
  %v141 = vsub.s32 0, %v140
  %v142 = vrot.slane %v137, %v141
  %v242 = vunpack.c.l.b16 %v39
  %v243 = vunpack.c.l.b16 %v40
  %v244 = vunpack.c.l.b16 %v41
  %v245 = vunpack.c.l.b16 %v42
  %v246 = vunpack.c.l.b16 %v43
  %v247 = vunpack.c.l.b16 %v44
  %v248 = vunpack.c.l.b16 %v45
  %v249 = vunpack.c.l.b16 %v46
  %v250 = vunpack.c.l.b16 %v47
  %v251 = vunpack.c.l.b16 %v48
  %v252 = vunpack.c.l.b16 %v49
  %v253 = vunpack.c.l.b16 %v50
  %v254 = vunpack.c.l.b16 %v51
  %v255 = vunpack.c.l.b16 %v52
  %v256 = vunpack.c.l.b16 %v53
  %v257 = vunpack.c.l.b16 %v54
  %v258 = vunpack.c.l.b16 %v55
  %v259 = vunpack.c.l.b16 %v56
  %v260 = vunpack.c.l.b16 %v57
  %v261 = vunpack.c.l.b16 %v58
  %v262 = vunpack.c.l.b16 %v59
  %v263 = vunpack.c.l.b16 %v60
  %v264 = vunpack.c.l.b16 %v61
  %v265 = vunpack.c.l.b16 %v62
  %v266 = vunpack.c.l.b16 %v63
  %v267 = vunpack.c.l.b16 %v64
  %v268 = vunpack.c.l.b16 %v65
  %v269 = vunpack.c.l.b16 %v66
  %v270 = vunpack.c.l.b16 %v67
  %v271 = vunpack.c.l.b16 %v68
  %v272 = vunpack.c.l.b16 %v69
  %v273 = vunpack.c.l.b16 %v70
  %v274 = vunpack.c.l.b16 %v71
  %v275 = vunpack.c.l.b16 %v72
  %v276 = vunpack.c.l.b16 %v73
  %v277 = vunpack.c.l.b16 %v74
  %v278 = vunpack.c.l.b16 %v75
  %v279 = vunpack.c.l.b16 %v76
  %v280 = vunpack.c.l.b16 %v77
  %v281 = vunpack.c.l.b16 %v78
  %v282 = vunpack.c.l.b16 %v79
  %v283 = vunpack.c.l.b16 %v80
  %v284 = vunpack.c.l.b16 %v81
  %v285 = vunpack.c.l.b16 %v82
  %v286 = vunpack.c.l.b16 %v83
  %v287 = vunpack.c.l.b16 %v84
  %v288 = vunpack.c.l.b16 %v85
  %v289 = vunpack.c.l.b16 %v86
  %v290 = vunpack.c.l.b16 %v87
  %v291 = vunpack.c.l.b16 %v88
  %v292 = vunpack.c.l.b16 %v89
  %v293 = vunpack.c.l.b16 %v90
  %v294 = vunpack.c.l.b16 %v91
  %v295 = vunpack.c.l.b16 %v92
  %v296 = vunpack.c.l.b16 %v93
  %v297 = vunpack.c.l.b16 %v94
  %v298 = vunpack.c.l.b16 %v95
  %v299 = vunpack.c.l.b16 %v96
  %v300 = vunpack.c.l.b16 %v97
  %v301 = vunpack.c.l.b16 %v98
  %v302 = vunpack.c.l.b16 %v99
  %v303 = vunpack.c.l.b16 %v100
  %v304 = vunpack.c.l.b16 %v101
  %v305 = vunpack.c.l.b16 %v102
  %v306 = vunpack.c.l.b16 %v103
  %v307 = vunpack.c.l.b16 %v104
  %v308 = vunpack.c.l.b16 %v105
  %v309 = vunpack.c.l.b16 %v106
  %v310 = vunpack.c.l.b16 %v107
  %v311 = vunpack.c.l.b16 %v108
  %v312 = vunpack.c.l.b16 %v109
  %v313 = vunpack.c.l.b16 %v110
  %v314 = vunpack.c.l.b16 %v111
  %v315 = vunpack.c.l.b16 %v112
  %v316 = vunpack.c.l.b16 %v113
  %v317 = vunpack.c.l.b16 %v114
  %v318 = vunpack.c.l.b16 %v115
  %v319 = vunpack.c.l.b16 %v116
  %v320 = vunpack.c.l.b16 %v117
  %v321 = vunpack.c.l.b16 %v118
  %v322 = vunpack.c.l.b16 %v119
  %v323 = vunpack.c.l.b16 %v120
  %v324 = vunpack.c.l.b16 %v121
  %v325 = vunpack.c.l.b16 %v122
  %v326 = vunpack.c.l.b16 %v123
  %v327 = vunpack.c.l.b16 %v124
  %v328 = vunpack.c.l.b16 %v125
  %v329 = vunpack.c.l.b16 %v126
  %v330 = vunpack.c.l.b16 %v127
  %v331 = vunpack.c.l.b16 %v128
  %v332 = vunpack.c.l.b16 %v129
  %v333 = vunpack.c.l.b16 %v130
  %v334 = vunpack.c.l.b16 %v131
  %v335 = vunpack.c.l.b16 %v132
  %v336 = vunpack.c.l.b16 %v133
  %v337 = vunpack.c.l.b16 %v134
  %v338 = vunpack.c.l.b16 %v135
  %v339 = vunpack.c.l.b16 %v136
  %v340 = vpack.c.b16 %v243, %v242
  %v341 = vpack.c.b16 %v245, %v244
  %v342 = vpack.c.b16 %v247, %v246
  %v343 = vpack.c.b16 %v249, %v248
  %v344 = vpack.c.b16 %v251, %v250
  %v345 = vpack.c.b16 %v253, %v252
  %v346 = vpack.c.b16 %v255, %v254
  %v347 = vpack.c.b16 %v257, %v256
  %v348 = vpack.c.b16 %v259, %v258
  %v349 = vpack.c.b16 %v261, %v260
  %v350 = vpack.c.b16 %v263, %v262
  %v351 = vpack.c.b16 %v265, %v264
  %v352 = vpack.c.b16 %v267, %v266
  %v353 = vpack.c.b16 %v269, %v268
  %v354 = vpack.c.b16 %v271, %v270
  %v355 = vpack.c.b16 %v273, %v272
  %v356 = vpack.c.b16 %v275, %v274
  %v357 = vpack.c.b16 %v277, %v276
  %v358 = vpack.c.b16 %v279, %v278
  %v359 = vpack.c.b16 %v281, %v280
  %v360 = vpack.c.b16 %v283, %v282
  %v361 = vpack.c.b16 %v285, %v284
  %v362 = vpack.c.b16 %v287, %v286
  %v363 = vpack.c.b16 %v289, %v288
  %v364 = vpack.c.b16 %v291, %v290
  %v365 = vpack.c.b16 %v293, %v292
  %v366 = vpack.c.b16 %v295, %v294
  %v367 = vpack.c.b16 %v297, %v296
  %v368 = vpack.c.b16 %v299, %v298
  %v369 = vpack.c.b16 %v301, %v300
  %v370 = vpack.c.b16 %v303, %v302
  %v371 = vpack.c.b16 %v305, %v304
  %v372 = vpack.c.b16 %v307, %v306
  %v373 = vpack.c.b16 %v309, %v308
  %v374 = vpack.c.b16 %v311, %v310
  %v375 = vpack.c.b16 %v313, %v312
  %v376 = vpack.c.b16 %v315, %v314
  %v377 = vpack.c.b16 %v317, %v316
  %v378 = vpack.c.b16 %v319, %v318
  %v379 = vpack.c.b16 %v321, %v320
  %v380 = vpack.c.b16 %v323, %v322
  %v381 = vpack.c.b16 %v325, %v324
  %v382 = vpack.c.b16 %v327, %v326
  %v383 = vpack.c.b16 %v329, %v328
  %v384 = vpack.c.b16 %v331, %v330
  %v385 = vpack.c.b16 %v333, %v332
  %v386 = vpack.c.b16 %v335, %v334
  %v387 = vpack.c.b16 %v337, %v336
  %v388 = vpack.c.b16 %v339, %v338
  %vm438 = vcmask 130048
  %v440 = vsel %vm438, %v38, 0
  %442 = vmatprep.subr.bf16.mxu0 0
  %443 = vmatpush1.bf16.msra.mxu0 %v340
  %444 = vmatprep.subr.bf16.mxu0 0
  %445 = vmatpush1.bf16.msra.mxu0 %v341
  %446 = vmatprep.subr.bf16.mxu0 0
  %447 = vmatpush1.bf16.msra.mxu0 %v342
  %448 = vmatprep.subr.bf16.mxu0 0
  %449 = vmatpush1.bf16.msra.mxu0 %v343
  %450 = vmatprep.subr.bf16.mxu0 0
  %451 = vmatpush1.bf16.msra.mxu0 %v344
  %452 = vmatprep.subr.bf16.mxu0 0
  %453 = vmatpush1.bf16.msra.mxu0 %v345
  %454 = vmatprep.subr.bf16.mxu0 0
  %455 = vmatpush1.bf16.msra.mxu0 %v346
  %456 = vmatprep.subr.bf16.mxu0 0
  %457 = vmatpush1.bf16.msra.mxu0 %v347
  %458 = vmatprep.subr.bf16.mxu0 0
  %459 = vmatpush1.bf16.msra.mxu0 %v348
  %460 = vmatprep.subr.bf16.mxu0 0
  %461 = vmatpush1.bf16.msra.mxu0 %v349
  %462 = vmatprep.subr.bf16.mxu0 0
  %463 = vmatpush1.bf16.msra.mxu0 %v350
  %464 = vmatprep.subr.bf16.mxu0 0
  %465 = vmatpush1.bf16.msra.mxu0 %v351
  %466 = vmatprep.subr.bf16.mxu0 0
  %467 = vmatpush1.bf16.msra.mxu0 %v352
  %468 = vmatprep.subr.bf16.mxu0 0
  %469 = vmatpush1.bf16.msra.mxu0 %v353
  %470 = vmatprep.subr.bf16.mxu0 0
  %471 = vmatpush1.bf16.msra.mxu0 %v354
  %472 = vmatprep.subr.bf16.mxu0 0
  %473 = vmatpush1.bf16.msra.mxu0 %v355
  %474 = vmatprep.mubr.bf16.mxu0 %v33
  %475 = vmatmul.mubr.bf16.gmra.mrb[0].mxu0 %v32
  %v476 = vpop.f32.mrb[0].mxu0
  %v477 = vadd.f32 %v142, %v476
  %v478 = vpop.f32.mrb[0].mxu0
  %v479 = vpop.f32.mrb[0].mxu0
  %v480 = vadd.f32 %v142, %v479
  %v481 = vpop.f32.mrb[0].mxu0
  %482 = vdwg.mxu0
  %483 = vmatprep.subr.bf16.mxu0 0
  %484 = vmatpush1.bf16.msra.mxu0 %v356
  %485 = vmatprep.subr.bf16.mxu0 0
  %486 = vmatpush1.bf16.msra.mxu0 %v357
  %487 = vmatprep.subr.bf16.mxu0 0
  %488 = vmatpush1.bf16.msra.mxu0 %v358
  %489 = vmatprep.subr.bf16.mxu0 0
  %490 = vmatpush1.bf16.msra.mxu0 %v359
  %491 = vmatprep.subr.bf16.mxu0 0
  %492 = vmatpush1.bf16.msra.mxu0 %v360
  %493 = vmatprep.subr.bf16.mxu0 0
  %494 = vmatpush1.bf16.msra.mxu0 %v361
  %495 = vmatprep.subr.bf16.mxu0 0
  %496 = vmatpush1.bf16.msra.mxu0 %v362
  %497 = vmatprep.subr.bf16.mxu0 0
  %498 = vmatpush1.bf16.msra.mxu0 %v363
  %499 = vmatprep.subr.bf16.mxu0 0
  %500 = vmatpush1.bf16.msra.mxu0 %v364
  %501 = vmatprep.subr.bf16.mxu0 0
  %502 = vmatpush1.bf16.msra.mxu0 %v365
  %503 = vmatprep.subr.bf16.mxu0 0
  %504 = vmatpush1.bf16.msra.mxu0 %v366
  %505 = vmatprep.subr.bf16.mxu0 0
  %506 = vmatpush1.bf16.msra.mxu0 %v367
  %507 = vmatprep.subr.bf16.mxu0 0
  %508 = vmatpush1.bf16.msra.mxu0 %v368
  %509 = vmatprep.subr.bf16.mxu0 0
  %510 = vmatpush1.bf16.msra.mxu0 %v369
  %511 = vmatprep.subr.bf16.mxu0 0
  %512 = vmatpush1.bf16.msra.mxu0 %v370
  %513 = vmatprep.subr.bf16.mxu0 0
  %514 = vmatpush1.bf16.msra.mxu0 %v371
  %515 = vmatprep.mubr.bf16.mxu0 %v35
  %516 = vmatmul.mubr.bf16.gmra.mrb[0].mxu0 %v34
  %v517 = vpop.f32.mrb[0].mxu0
  %v518 = vadd.f32 %v477, %v517
  %v519 = vpop.f32.mrb[0].mxu0
  %v520 = vpop.f32.mrb[0].mxu0
  %v521 = vadd.f32 %v480, %v520
  %v522 = vpop.f32.mrb[0].mxu0
  %523 = vdwg.mxu0
  %524 = vmatprep.subr.bf16.mxu0 0
  %525 = vmatpush1.bf16.msra.mxu0 %v372
  %526 = vmatprep.subr.bf16.mxu0 0
  %527 = vmatpush1.bf16.msra.mxu0 %v373
  %528 = vmatprep.subr.bf16.mxu0 0
  %529 = vmatpush1.bf16.msra.mxu0 %v374
  %530 = vmatprep.subr.bf16.mxu0 0
  %531 = vmatpush1.bf16.msra.mxu0 %v375
  %532 = vmatprep.subr.bf16.mxu0 0
  %533 = vmatpush1.bf16.msra.mxu0 %v376
  %534 = vmatprep.subr.bf16.mxu0 0
  %535 = vmatpush1.bf16.msra.mxu0 %v377
  %536 = vmatprep.subr.bf16.mxu0 0
  %537 = vmatpush1.bf16.msra.mxu0 %v378
  %538 = vmatprep.subr.bf16.mxu0 0
  %539 = vmatpush1.bf16.msra.mxu0 %v379
  %540 = vmatprep.subr.bf16.mxu0 0
  %541 = vmatpush1.bf16.msra.mxu0 %v380
  %542 = vmatprep.subr.bf16.mxu0 0
  %543 = vmatpush1.bf16.msra.mxu0 %v381
  %544 = vmatprep.subr.bf16.mxu0 0
  %545 = vmatpush1.bf16.msra.mxu0 %v382
  %546 = vmatprep.subr.bf16.mxu0 0
  %547 = vmatpush1.bf16.msra.mxu0 %v383
  %548 = vmatprep.subr.bf16.mxu0 0
  %549 = vmatpush1.bf16.msra.mxu0 %v384
  %550 = vmatprep.subr.bf16.mxu0 0
  %551 = vmatpush1.bf16.msra.mxu0 %v385
  %552 = vmatprep.subr.bf16.mxu0 0
  %553 = vmatpush1.bf16.msra.mxu0 %v386
  %554 = vmatprep.subr.bf16.mxu0 0
  %555 = vmatpush1.bf16.msra.mxu0 %v387
  %556 = vmatprep.mubr.bf16.mxu0 %v37
  %557 = vmatmul.mubr.bf16.gmra.mrb[0].mxu0 %v36
  %v558 = vpop.f32.mrb[0].mxu0
  %v559 = vadd.f32 %v518, %v558
  %v560 = vpop.f32.mrb[0].mxu0
  %v561 = vpop.f32.mrb[0].mxu0
  %v562 = vadd.f32 %v521, %v561
  %v563 = vpop.f32.mrb[0].mxu0
  %564 = vdwg.mxu0
  %565 = vmatprep.subr.bf16.mxu0 0
  %566 = vmatpush1.bf16.msra.mxu0 %v388
  %567 = vmatprep.subr.bf16.mxu0 0
  %568 = vmatpush1.bf16.msra.mxu0 0
  %569 = vmatprep.subr.bf16.mxu0 0
  %570 = vmatpush1.bf16.msra.mxu0 0
  %571 = vmatprep.subr.bf16.mxu0 0
  %572 = vmatpush1.bf16.msra.mxu0 0
  %573 = vmatprep.subr.bf16.mxu0 0
  %574 = vmatpush1.bf16.msra.mxu0 0
  %575 = vmatprep.subr.bf16.mxu0 0
  %576 = vmatpush1.bf16.msra.mxu0 0
  %577 = vmatprep.subr.bf16.mxu0 0
  %578 = vmatpush1.bf16.msra.mxu0 0
  %579 = vmatprep.subr.bf16.mxu0 0
  %580 = vmatpush1.bf16.msra.mxu0 0
  %581 = vmatprep.subr.bf16.mxu0 0
  %582 = vmatpush1.bf16.msra.mxu0 0
  %583 = vmatprep.subr.bf16.mxu0 0
  %584 = vmatpush1.bf16.msra.mxu0 0
  %585 = vmatprep.subr.bf16.mxu0 0
  %586 = vmatpush1.bf16.msra.mxu0 0
  %587 = vmatprep.subr.bf16.mxu0 0
  %588 = vmatpush1.bf16.msra.mxu0 0
  %589 = vmatprep.subr.bf16.mxu0 0
  %590 = vmatpush1.bf16.msra.mxu0 0
  %591 = vmatprep.subr.bf16.mxu0 0
  %592 = vmatpush1.bf16.msra.mxu0 0
  %593 = vmatprep.subr.bf16.mxu0 0
  %594 = vmatpush1.bf16.msra.mxu0 0
  %595 = vmatprep.subr.bf16.mxu0 0
  %596 = vmatpush1.bf16.msra.mxu0 0
  %597 = vmatprep.mubr.bf16.mxu0 0
  %598 = vmatmul.mubr.bf16.gmra.mrb[0].mxu0 %v440
  %v599 = vpop.f32.mrb[0].mxu0
  %v600 = vadd.f32 %v559, %v599
  %v601 = vpop.f32.mrb[0].mxu0
  %v602 = vpop.f32.mrb[0].mxu0
  %v603 = vadd.f32 %v562, %v602
  %v604 = vpop.f32.mrb[0].mxu0
  %605 = vdwg.mxu0
  %v606 = vmax.f32 %v600, 0.0
  %v607 = vmax.f32 %v603, 0.0
  %s608 = sadd.s32 0, 1
  %s609 = smul.u32 %s608, 16
  %p610 = scmp.gt.s32.totalorder %s609, 8
  %p611 = scmp.le.s32.totalorder %s609, 8
  // Predicated region
  $region14: #{_mlp_forward.3} parent=0 // pred_check
    %p612 = pneg %p611
  $region15: #{_mlp_forward.3} parent=0 // pred_check_branch
    %614 = sbr.rel (%p612) target = $region17
  $region16: #{_mlp_forward.3} parent=0 // pred_region
    %vm615 = vcmask 523264
    %v616 = vsel %vm615, %v606, 0.0
    %v617 = vsel %vm615, %v607, 0.0
    %v618 = vadd.f32 %v616, %v617
    %v619 = vrot.slane %v618, 4
    %v620 = vadd.f32 %v618, %v619
    %v621 = vrot.slane %v620, 2
    %v622 = vadd.f32 %v620, %v621
    %v623 = vrot.slane %v622, 1
    %v624 = vadd.f32 %v622, %v623
    %vm625 = vcmask 516096
    %626 = vst.msk [vmem:[%s4] sm:$0x1] %vm625, %v624
    %v627 = vmul.f32 %v606, %v606
    %v628 = vmul.f32 %v607, %v607
    %v629 = vsel %vm615, %v627, 0.0
    %v630 = vsel %vm615, %v628, 0.0
    %v631 = vadd.f32 %v629, %v630
    %v632 = vrot.slane %v631, 4
    %v633 = vadd.f32 %v631, %v632
    %v634 = vrot.slane %v633, 2
    %v635 = vadd.f32 %v633, %v634
    %v636 = vrot.slane %v635, 1
    %v637 = vadd.f32 %v635, %v636
    %638 = vst.msk [vmem:[%s5] sm:$0x1] %vm625, %v637
  $region17: #{_mlp_forward.3} parent=0 // pred_fallthru
    _
  // Predicated region
  $region18: #{_mlp_forward.3} parent=0 // pred_check
    %p639 = pneg %p610
  $region19: #{_mlp_forward.3} parent=0 // pred_check_branch
    %641 = sbr.rel (%p639) target = $region21
  $region20: #{_mlp_forward.3} parent=0 // pred_region
    %s642 = smul.u32 0, 16
    %v643 = vlaneseq
    %v644 = vshrl.u32 %v643, 7
    %v645 = vadd.s32 %v644, 8
    %v646 = vstv %s642
    %v647 = vadd.s32 %v646, %v644
    %v648 = vadd.s32 %v646, %v645
    %vm649 = vcmp.lt.s32.totalorder %v647, 8
    %vm650 = vcmp.lt.s32.totalorder %v648, 8
    %v651 = vsel %vm649, %v606, 0.0
    %v652 = vsel %vm650, %v607, 0.0
    %vm653 = vcmask 523264
    %v654 = vsel %vm653, %v651, 0.0
    %v655 = vsel %vm653, %v652, 0.0
    %v656 = vadd.f32 %v654, %v655
    %v657 = vrot.slane %v656, 4
    %v658 = vadd.f32 %v656, %v657
    %v659 = vrot.slane %v658, 2
    %v660 = vadd.f32 %v658, %v659
    %v661 = vrot.slane %v660, 1
    %v662 = vadd.f32 %v660, %v661
    %vm663 = vcmask 516096
    %664 = vst.msk [vmem:[%s4] sm:$0x1] %vm663, %v662
    %v665 = vmul.f32 %v651, %v651
    %v666 = vmul.f32 %v652, %v652
    %v667 = vsel %vm653, %v665, 0.0
    %v668 = vsel %vm653, %v666, 0.0
    %v669 = vadd.f32 %v667, %v668
    %v670 = vrot.slane %v669, 4
    %v671 = vadd.f32 %v669, %v670
    %v672 = vrot.slane %v671, 2
    %v673 = vadd.f32 %v671, %v672
    %v674 = vrot.slane %v673, 1
    %v675 = vadd.f32 %v673, %v674
    %676 = vst.msk [vmem:[%s5] sm:$0x1] %vm663, %v675
  $region21: #{_mlp_forward.3} parent=0 // pred_fallthru
    _
  %v677 = vpack.c.bf16 %v607, %v606
  %v679 = vunpack.c.l.b16 %v677
  %v680 = vunpack.c.h.b16 %v677
  %v681 = vpack.c.b16 %v679, %v679
  %v682 = vpack.c.b16 %v680, %v680
  %vm685 = vcmask 519168
  %686 = vst.msk [vmem:[%s3] sm:$0xf] %vm685, %v681
  %687 = vst.msk [vmem:[%s3 + $0x4] sm:$0xf] %vm685, %v682
  // Predicated region
  $region22: #{_mlp_forward.3} parent=0 // pred_check
    _
  $region23: #{_mlp_forward.3} parent=0 // pred_check_branch
    %689 = sbr.rel (0) target = $region25
  $region24: #{_mlp_forward.3} parent=0 // pred_region
    _
  $region25: #{_mlp_forward.3} parent=0 // pred_fallthru
    _
  // Predicated region
  $region26: #{_mlp_forward.3} parent=0 // pred_check
    _
  $region27: #{_mlp_forward.3} parent=0 // pred_check_branch
    %691 = sbr.rel (0) target = $region29
  $region28: #{_mlp_forward.3} parent=0 // pred_region
    _
  $region29: #{_mlp_forward.3} parent=0 // pred_fallthru
    _
  // Predicated region
  $region30: #{_mlp_forward.3} parent=0 // pred_check
    _
  $region31: #{_mlp_forward.3} parent=0 // pred_check_branch
    %693 = sbr.rel (0) target = $region33
  $region32: #{_mlp_forward.3} parent=0 // pred_region
    _
  $region33: #{_mlp_forward.3} parent=0 // pred_fallthru
    _
  // Predicated region
  $region34: #{_mlp_forward.3} parent=0 // pred_check
    _
  $region35: #{_mlp_forward.3} parent=0 // pred_check_branch
    %695 = sbr.rel (0) target = $region37
  $region36: #{_mlp_forward.3} parent=0 // pred_region
    _
  $region37: #{_mlp_forward.3} parent=0 // pred_fallthru
    _
  // Predicated region
  $region38: #{_mlp_forward.3} parent=0 // pred_check
    _
  $region39: #{_mlp_forward.3} parent=0 // pred_check_branch
    %697 = sbr.rel (0) target = $region41
  $region40: #{_mlp_forward.3} parent=0 // pred_region
    _
  $region41: #{_mlp_forward.3} parent=0 // pred_fallthru
    _
  // Predicated region
  $region42: #{_mlp_forward.3} parent=0 // pred_check
    _
  $region43: #{_mlp_forward.3} parent=0 // pred_check_branch
    %699 = sbr.rel (0) target = $region45
  $region44: #{_mlp_forward.3} parent=0 // pred_region
    _
  $region45: #{_mlp_forward.3} parent=0 // pred_fallthru
    _

</llo_original>
